<compile_context>
chip_gen: v5e
topology: v5e:2x2
jax: 0.10.0
libtpu: 0.0.40
codegen_flags: <defaults>
</compile_context>

<pallas_src>
import jax
import jax.numpy as jnp
from jax import lax
from jax.experimental import pallas as pl
from jax.experimental.pallas import tpu as pltpu

NUM_LAYERS = 2          # kernel is specialized to the 2-layer configuration
TIME_BLOCK = 8          # timesteps per grid step (review: 8-32)


# ----------------------------------------------------------------------------
# Kernel 1: hoisted layer-0 input projection over the whole sequence.
#   (S*B, I) @ (I, 4H) + b0  ->  (S*B, 4H)  f32 gate pre-activations.
# (At demo sizes a single full-array block is plenty; at production sizes this
# is a standard tiled GEMM.)
# ----------------------------------------------------------------------------
def _in_proj_kernel(x_ref, w_ref, b_ref, o_ref):
    o_ref[...] = (
        jnp.dot(x_ref[...].astype(w_ref.dtype), w_ref[...],
                preferred_element_type=jnp.float32)
        + b_ref[...]
    )


# ----------------------------------------------------------------------------
# Kernel 2: the sequential LSTM recurrence (2 stacked layers), time-blocked.
# ----------------------------------------------------------------------------
def _lstm_seq_kernel(
    xg_ref,     # (TB, BT, 4H) f32  precomputed layer-0 gate pre-activations
    whh0_ref,   # (H, 4H)     bf16  layer-0 recurrent weight (transposed)
    w1_ref,     # (2H, 4H)    bf16  layer-1 fused [Wxh1; Whh1] (transposed)
    b1_ref,     # (1, 4H)     f32   layer-1 combined bias
    out_ref,    # (TB, BT, H)       output slab (h of last layer per step)
    hN_ref,     # (L, BT, H)        final hidden state (resident block)
    cN_ref,     # (L, BT, H)        final cell state   (resident block)
    h_st,       # VMEM scratch (L, BT, H) f32 - carried across time blocks
    c_st,       # VMEM scratch (L, BT, H) f32
):
    t_blk = pl.program_id(1)
    n_tblk = pl.num_programs(1)
    TB = xg_ref.shape[0]
    H = h_st.shape[-1]

    @pl.when(t_blk == 0)
    def _():                       # hc=None path of RNNBase.forward -> zeros
        h_st[...] = jnp.zeros_like(h_st)
        c_st[...] = jnp.zeros_like(c_st)

    # Hoist the (grid-invariant) weight/bias loads out of the unrolled loop.
    whh0 = whh0_ref[...]
    w1 = w1_ref[...]
    b1 = b1_ref[...]

    def gate_math(gates, c_prev):
        # PyTorch chunk order along dim 1: input, forget, cell, output
        i_g = jax.nn.sigmoid(gates[:, 0 * H:1 * H])
        f_g = jax.nn.sigmoid(gates[:, 1 * H:2 * H])
        c_g = jnp.tanh(gates[:, 2 * H:3 * H])
        o_g = jax.nn.sigmoid(gates[:, 3 * H:4 * H])
        c_new = f_g * c_prev + i_g * c_g
        h_new = o_g * jnp.tanh(c_new)
        return h_new, c_new

    def step(tt, carry):
        h0, c0, h1, c1 = carry
        # layer 0: x-projection (incl. bias) was hoisted out of the recurrence,
        # only the recurrent h @ Whh0 matmul remains in the loop.
        g0 = xg_ref[tt] + jnp.dot(h0.astype(jnp.bfloat16), whh0,
                                  preferred_element_type=jnp.float32)
        h0, c0 = gate_math(g0, c0)
        # layer 1: single fused matmul on [h0_new, h1_prev].
        z = jnp.concatenate([h0, h1], axis=-1).astype(jnp.bfloat16)
        g1 = jnp.dot(z, w1, preferred_element_type=jnp.float32) + b1
        h1, c1 = gate_math(g1, c1)
        # output[t] = hidden of last layer
        out_ref[tt] = h1.astype(out_ref.dtype)
        return h0, c0, h1, c1

    carry = (h_st[0], c_st[0], h_st[1], c_st[1])
    h0, c0, h1, c1 = lax.fori_loop(0, TB, step, carry, unroll=True)

    # carry state to the next time block
    h_st[0], c_st[0] = h0, c0
    h_st[1], c_st[1] = h1, c1

    # flush the final (h_n, c_n) only once, on the last time block
    @pl.when(t_blk == n_tblk - 1)
    def _():
        hN_ref[0] = h0.astype(hN_ref.dtype)
        hN_ref[1] = h1.astype(hN_ref.dtype)
        cN_ref[0] = c0.astype(cN_ref.dtype)
        cN_ref[1] = c1.astype(cN_ref.dtype)


# ----------------------------------------------------------------------------
# Parameter plumbing
# ----------------------------------------------------------------------------
def init_lstm_params(key, input_size, hidden_size, num_layers=NUM_LAYERS):
    """Mimics RNNCellBase/LSTMCell.reset_parameters of the spec module:
    uniform(-1/sqrt(H), 1/sqrt(H)) for every parameter, then the forget-gate
    bias chunk of BOTH fc_xh.bias and fc_hh.bias set to 1/hidden_size.
    Returns per-layer (w_xh(4H,in), w_hh(4H,H), b_xh(4H,), b_hh(4H,)) in f32
    (PyTorch Linear layout)."""
    std = 1.0 / (hidden_size ** 0.5)
    incr_bias = 1.0 / hidden_size
    params = []
    sizes = [input_size] + [hidden_size] * (num_layers - 1)
    for in_sz in sizes:
        key, k1, k2, k3, k4 = jax.random.split(key, 5)
        w_xh = jax.random.uniform(k1, (4 * hidden_size, in_sz),
                                  jnp.float32, -std, std)
        b_xh = jax.random.uniform(k2, (4 * hidden_size,), jnp.float32, -std, std)
        w_hh = jax.random.uniform(k3, (4 * hidden_size, hidden_size),
                                  jnp.float32, -std, std)
        b_hh = jax.random.uniform(k4, (4 * hidden_size,), jnp.float32, -std, std)
        b_xh = b_xh.at[hidden_size:2 * hidden_size].set(incr_bias)
        b_hh = b_hh.at[hidden_size:2 * hidden_size].set(incr_bias)
        params.append((w_xh, w_hh, b_xh, b_hh))
    return params


def prepare_kernel_params(params):
    """PyTorch-layout f32 params -> kernel layout (transposed, fused, bf16)."""
    (wxh0, whh0, bxh0, bhh0), (wxh1, whh1, bxh1, bhh1) = params
    return dict(
        wxh0=jnp.asarray(wxh0.T, jnp.bfloat16),                        # (I, 4H)
        whh0=jnp.asarray(whh0.T, jnp.bfloat16),                        # (H, 4H)
        b0=(bxh0 + bhh0).reshape(1, -1).astype(jnp.float32),           # (1, 4H)
        w1=jnp.concatenate([wxh1.T, whh1.T], axis=0).astype(jnp.bfloat16),  # (2H, 4H)
        b1=(bxh1 + bhh1).reshape(1, -1).astype(jnp.float32),           # (1, 4H)
    )


# ----------------------------------------------------------------------------
# Wrapper: RNNBase(LSTM, num_layers=2, bias=True, batch_first=False,
#                  bidirectional=False) forward.
# ----------------------------------------------------------------------------
def rnn_base_lstm_forward(x, params):
    """x: (seq_len, batch, input_size) f32.  Returns (output, (h_n, c_n))."""
    assert len(params) == NUM_LAYERS
    S, B, I = x.shape
    H = params[0][1].shape[1]
    L = NUM_LAYERS
    G = 4 * H
    kp = prepare_kernel_params(params)

    # ---- hoisted layer-0 input projection: one GEMM over the whole sequence.
    xg2d = pl.pallas_call(
        _in_proj_kernel,
        out_shape=jax.ShapeDtypeStruct((S * B, G), jnp.float32),
    )(x.reshape(S * B, I), kp["wxh0"], kp["b0"])
    xg = xg2d.reshape(S, B, G)

    # ---- recurrent kernel: (batch_tiles "parallel", time_blocks "arbitrary").
    TB = TIME_BLOCK if S % TIME_BLOCK == 0 else S
    BT = B // 2 if (B % 16 == 0) else B   # 2 batch tiles -> both v7x cores busy
    n_b, n_t = B // BT, S // TB

    grid_spec = pltpu.PrefetchScalarGridSpec(
        num_scalar_prefetch=0,
        grid=(n_b, n_t),
        in_specs=[
            pl.BlockSpec((TB, BT, G), lambda b, t: (t, b, 0)),     # xg
            pl.BlockSpec((H, G), lambda b, t: (0, 0)),             # whh0 (bf16)
            pl.BlockSpec((2 * H, G), lambda b, t: (0, 0)),         # w1   (bf16)
            pl.BlockSpec((1, G), lambda b, t: (0, 0)),             # b1
        ],
        out_specs=[
            pl.BlockSpec((TB, BT, H), lambda b, t: (t, b, 0)),     # output
            pl.BlockSpec((L, BT, H), lambda b, t: (0, b, 0)),      # h_n
            pl.BlockSpec((L, BT, H), lambda b, t: (0, b, 0)),      # c_n
        ],
        scratch_shapes=[
            pltpu.VMEM((L, BT, H), jnp.float32),                   # h state
            pltpu.VMEM((L, BT, H), jnp.float32),                   # c state
        ],
    )

    weight_bytes = (H * G + 2 * H * G) * 2 + G * 4
    cost = pl.CostEstimate(
        flops=2 * S * B * G * 3 * H + 40 * S * B * H * L,
        transcendentals=5 * S * B * H * L,
        bytes_accessed=S * B * G * 4 + S * B * H * 4 + 2 * L * B * H * 4
        + weight_bytes,
    )

    out, h_n, c_n = pl.pallas_call(
        _lstm_seq_kernel,
        out_shape=(
            jax.ShapeDtypeStruct((S, B, H), x.dtype),
            jax.ShapeDtypeStruct((L, B, H), x.dtype),
            jax.ShapeDtypeStruct((L, B, H), x.dtype),
        ),
        grid_spec=grid_spec,
        compiler_params=pltpu.CompilerParams(
            dimension_semantics=("parallel", "arbitrary"),
            vmem_limit_bytes=32 * 1024 * 1024,
        ),
        cost_estimate=cost,
    )(xg, kp["whh0"], kp["w1"], kp["b1"])
    return out, (h_n, c_n)


# ----------------------------------------------------------------------------
# Pure-JAX f32 reference (mirrors RNNBase.forward with LSTMCell).
# ----------------------------------------------------------------------------
def rnn_base_lstm_reference(x, params):
    S, B, _ = x.shape
    H = params[0][1].shape[1]
    L = len(params)
    h = jnp.zeros((L, B, H), jnp.float32)
    c = jnp.zeros((L, B, H), jnp.float32)
    outs = []
    for t in range(S):
        inp = x[t]
        hs, cs = [], []
        for l, (wxh, whh, bxh, bhh) in enumerate(params):
            gates = inp @ wxh.T + bxh + h[l] @ whh.T + bhh
            i_g = jax.nn.sigmoid(gates[:, 0 * H:1 * H])
            f_g = jax.nn.sigmoid(gates[:, 1 * H:2 * H])
            c_g = jnp.tanh(gates[:, 2 * H:3 * H])
            o_g = jax.nn.sigmoid(gates[:, 3 * H:4 * H])
            c_new = f_g * c[l] + i_g * c_g
            h_new = o_g * jnp.tanh(c_new)
            hs.append(h_new)
            cs.append(c_new)
            inp = h_new
        h = jnp.stack(hs)
        c = jnp.stack(cs)
        outs.append(h[-1])
    return jnp.stack(outs), (h, c)


if __name__ == "__main__":
    SEQ, BATCH, INPUT, HIDDEN = 16, 4, 16, 32   # SEQ=16 -> 2 time blocks

    key = jax.random.PRNGKey(0)
    kx, kp = jax.random.split(key)
    x = jax.random.normal(kx, (SEQ, BATCH, INPUT), jnp.float32)
    params = init_lstm_params(kp, INPUT, HIDDEN)

    fwd = jax.jit(rnn_base_lstm_forward)
    out, (h_n, c_n) = fwd(x, params)
    jax.block_until_ready((out, h_n, c_n))

    out_ref, (h_ref, c_ref) = rnn_base_lstm_reference(x, params)
    assert out.shape == (SEQ, BATCH, HIDDEN)
    assert h_n.shape == (NUM_LAYERS, BATCH, HIDDEN)
    assert c_n.shape == (NUM_LAYERS, BATCH, HIDDEN)
    # bf16 matmul operands (f32 accumulation) vs f32 reference -> bf16-level tol.
    assert jnp.allclose(out, out_ref, rtol=2e-2, atol=2e-2)
    assert jnp.allclose(h_n, h_ref, rtol=2e-2, atol=2e-2)
    assert jnp.allclose(c_n, c_ref, rtol=2e-2, atol=2e-2)

    print("KERNEL_OK")
</pallas_src>

<mosaic_0001>
module attributes {stable_mosaic.version = 11 : i64} {
  func.func @_in_proj_kernel(%arg0: memref<64x16xf32, #tpu.memory_space<vmem>>, %arg1: memref<16x128xbf16, #tpu.memory_space<vmem>>, %arg2: memref<1x128xf32, #tpu.memory_space<vmem>>, %arg3: memref<64x128xf32, #tpu.memory_space<vmem>>) attributes {dimension_semantics = [], scalar_prefetch = 0 : i64, scratch_operands = 0 : i64, tpu.core_type = #tpu.core_type<tc>} {
    %c0 = arith.constant 0 : index
    %c0_0 = arith.constant 0 : index
    %0 = vector.load %arg0[%c0, %c0_0] : memref<64x16xf32, #tpu.memory_space<vmem>>, vector<64x16xf32>
    %1 = arith.truncf %0 : vector<64x16xf32> to vector<64x16xbf16>
    %c0_1 = arith.constant 0 : index
    %c0_2 = arith.constant 0 : index
    %2 = vector.load %arg1[%c0_1, %c0_2] : memref<16x128xbf16, #tpu.memory_space<vmem>>, vector<16x128xbf16>
    %cst = arith.constant dense<0.000000e+00> : vector<64x128xf32>
    %3 = tpu.matmul %1, %2, %cst {dimension_numbers = #tpu.dot_dimension_numbers<[1], [0], [0], [1], [0, 0, 1, 1], [], []>} : vector<64x16xbf16>, vector<16x128xbf16>, vector<64x128xf32> -> vector<64x128xf32>
    %c0_3 = arith.constant 0 : index
    %c0_4 = arith.constant 0 : index
    %4 = vector.load %arg2[%c0_3, %c0_4] : memref<1x128xf32, #tpu.memory_space<vmem>>, vector<1x128xf32>
    %5 = vector.broadcast %4 : vector<1x128xf32> to vector<64x128xf32>
    %6 = arith.addf %3, %5 : vector<64x128xf32>
    %c0_5 = arith.constant 0 : index
    %c0_6 = arith.constant 0 : index
    %7 = vector.load %arg3[%c0_5, %c0_6] : memref<64x128xf32, #tpu.memory_space<vmem>>, vector<64x128xf32>
    tpu.vector_store %arg3[%c0_5, %c0_6], %6 {strides = array<i32>} : memref<64x128xf32, #tpu.memory_space<vmem>>, vector<64x128xf32>,
    return
  }
}

module attributes {stable_mosaic.version = 11 : i64} {
  func.func @_lstm_seq_kernel(%arg0: i32, %arg1: i32, %arg2: memref<8x4x128xf32, #tpu.memory_space<vmem>>, %arg3: memref<32x128xbf16, #tpu.memory_space<vmem>>, %arg4: memref<64x128xbf16, #tpu.memory_space<vmem>>, %arg5: memref<1x128xf32, #tpu.memory_space<vmem>>, %arg6: memref<8x4x32xf32, #tpu.memory_space<vmem>>, %arg7: memref<2x4x32xf32, #tpu.memory_space<vmem>>, %arg8: memref<2x4x32xf32, #tpu.memory_space<vmem>>, %arg9: memref<2x4x32xf32, #tpu.memory_space<vmem>>, %arg10: memref<2x4x32xf32, #tpu.memory_space<vmem>>) attributes {dimension_semantics = [#tpu.dimension_semantics<parallel>, #tpu.dimension_semantics<arbitrary>], iteration_bounds = array<i64: 1, 2>, scalar_prefetch = 0 : i64, scratch_operands = 2 : i64, tpu.core_type = #tpu.core_type<tc>, window_params = [{transform_indices = @transform_0, window_bounds = array<i64: 8, 4, 128>}, {pipeline_mode = #tpu.pipeline_mode<synchronous>, transform_indices = @transform_1, window_bounds = array<i64: 32, 128>}, {pipeline_mode = #tpu.pipeline_mode<synchronous>, transform_indices = @transform_2, window_bounds = array<i64: 64, 128>}, {pipeline_mode = #tpu.pipeline_mode<synchronous>, transform_indices = @transform_3, window_bounds = array<i64: 1, 128>}, {transform_indices = @transform_4, window_bounds = array<i64: 8, 4, 32>}, {transform_indices = @transform_5, window_bounds = array<i64: 2, 4, 32>}, {transform_indices = @transform_6, window_bounds = array<i64: 2, 4, 32>}]} {
    %c0_i32 = arith.constant 0 : i32
    %0 = arith.cmpi eq, %arg1, %c0_i32 : i32
    %1 = arith.extui %0 : i1 to i32
    %c0_i32_0 = arith.constant 0 : i32
    %2 = arith.cmpi ne, %1, %c0_i32_0 : i32
    scf.if %2 {
      %cst_127 = arith.constant 0.000000e+00 : f32
      %549 = vector.broadcast %cst_127 : f32 to vector<2x4x32xf32>
      %c0_128 = arith.constant 0 : index
      %c0_129 = arith.constant 0 : index
      %c0_130 = arith.constant 0 : index
      %550 = vector.load %arg9[%c0_128, %c0_129, %c0_130] : memref<2x4x32xf32, #tpu.memory_space<vmem>>, vector<2x4x32xf32>
      tpu.vector_store %arg9[%c0_128, %c0_129, %c0_130], %549 {strides = array<i32>} : memref<2x4x32xf32, #tpu.memory_space<vmem>>, vector<2x4x32xf32>,
      %cst_131 = arith.constant 0.000000e+00 : f32
      %551 = vector.broadcast %cst_131 : f32 to vector<2x4x32xf32>
      %c0_132 = arith.constant 0 : index
      %c0_133 = arith.constant 0 : index
      %c0_134 = arith.constant 0 : index
      %552 = vector.load %arg10[%c0_132, %c0_133, %c0_134] : memref<2x4x32xf32, #tpu.memory_space<vmem>>, vector<2x4x32xf32>
      tpu.vector_store %arg10[%c0_132, %c0_133, %c0_134], %551 {strides = array<i32>} : memref<2x4x32xf32, #tpu.memory_space<vmem>>, vector<2x4x32xf32>,
    } else {
    }
    %c0 = arith.constant 0 : index
    %c0_1 = arith.constant 0 : index
    %3 = vector.load %arg3[%c0, %c0_1] : memref<32x128xbf16, #tpu.memory_space<vmem>>, vector<32x128xbf16>
    %c0_2 = arith.constant 0 : index
    %c0_3 = arith.constant 0 : index
    %4 = vector.load %arg4[%c0_2, %c0_3] : memref<64x128xbf16, #tpu.memory_space<vmem>>, vector<64x128xbf16>
    %c0_4 = arith.constant 0 : index
    %c0_5 = arith.constant 0 : index
    %5 = vector.load %arg5[%c0_4, %c0_5] : memref<1x128xf32, #tpu.memory_space<vmem>>, vector<1x128xf32>
    %c0_6 = arith.constant 0 : index
    %c0_7 = arith.constant 0 : index
    %c0_8 = arith.constant 0 : index
    %6 = vector.load %arg9[%c0_6, %c0_7, %c0_8] : memref<2x4x32xf32, #tpu.memory_space<vmem>>, vector<1x4x32xf32>
    %7 = vector.shape_cast %6 : vector<1x4x32xf32> to vector<4x32xf32>
    %c0_9 = arith.constant 0 : index
    %c0_10 = arith.constant 0 : index
    %c0_11 = arith.constant 0 : index
    %8 = vector.load %arg10[%c0_9, %c0_10, %c0_11] : memref<2x4x32xf32, #tpu.memory_space<vmem>>, vector<1x4x32xf32>
    %9 = vector.shape_cast %8 : vector<1x4x32xf32> to vector<4x32xf32>
    %c1 = arith.constant 1 : index
    %c0_12 = arith.constant 0 : index
    %c0_13 = arith.constant 0 : index
    %10 = vector.load %arg9[%c1, %c0_12, %c0_13] : memref<2x4x32xf32, #tpu.memory_space<vmem>>, vector<1x4x32xf32>
    %11 = vector.shape_cast %10 : vector<1x4x32xf32> to vector<4x32xf32>
    %c1_14 = arith.constant 1 : index
    %c0_15 = arith.constant 0 : index
    %c0_16 = arith.constant 0 : index
    %12 = vector.load %arg10[%c1_14, %c0_15, %c0_16] : memref<2x4x32xf32, #tpu.memory_space<vmem>>, vector<1x4x32xf32>
    %13 = vector.shape_cast %12 : vector<1x4x32xf32> to vector<4x32xf32>
    %c0_i32_17 = arith.constant 0 : i32
    %14 = arith.index_cast %c0_i32_17 : i32 to index
    %c0_18 = arith.constant 0 : index
    %c0_19 = arith.constant 0 : index
    %15 = vector.load %arg2[%14, %c0_18, %c0_19] : memref<8x4x128xf32, #tpu.memory_space<vmem>>, vector<1x4x128xf32>
    %16 = vector.shape_cast %15 : vector<1x4x128xf32> to vector<4x128xf32>
    %17 = arith.truncf %7 : vector<4x32xf32> to vector<4x32xbf16>
    %cst = arith.constant dense<0.000000e+00> : vector<4x128xf32>
    %18 = tpu.matmul %17, %3, %cst {dimension_numbers = #tpu.dot_dimension_numbers<[1], [0], [0], [1], [0, 0, 1, 1], [], []>} : vector<4x32xbf16>, vector<32x128xbf16>, vector<4x128xf32> -> vector<4x128xf32>
    %19 = arith.addf %16, %18 : vector<4x128xf32>
    %20 = vector.extract_strided_slice %19 {offsets = [0, 0], sizes = [4, 32], strides = [1, 1]} : vector<4x128xf32> to vector<4x32xf32>
    %21 = arith.negf %20 : vector<4x32xf32>
    %22 = math.exp %21 : vector<4x32xf32>
    %cst_20 = arith.constant 1.000000e+00 : f32
    %23 = vector.broadcast %cst_20 : f32 to vector<4x32xf32>
    %24 = arith.addf %23, %22 : vector<4x32xf32>
    %25 = arith.divf %23, %24 : vector<4x32xf32>
    %26 = vector.extract_strided_slice %19 {offsets = [0, 32], sizes = [4, 32], strides = [1, 1]} : vector<4x128xf32> to vector<4x32xf32>
    %27 = arith.negf %26 : vector<4x32xf32>
    %28 = math.exp %27 : vector<4x32xf32>
    %cst_21 = arith.constant 1.000000e+00 : f32
    %29 = vector.broadcast %cst_21 : f32 to vector<4x32xf32>
    %30 = arith.addf %29, %28 : vector<4x32xf32>
    %31 = arith.divf %29, %30 : vector<4x32xf32>
    %32 = vector.extract_strided_slice %19 {offsets = [0, 64], sizes = [4, 32], strides = [1, 1]} : vector<4x128xf32> to vector<4x32xf32>
    %33 = math.tanh %32 : vector<4x32xf32>
    %34 = vector.extract_strided_slice %19 {offsets = [0, 96], sizes = [4, 32], strides = [1, 1]} : vector<4x128xf32> to vector<4x32xf32>
    %35 = arith.negf %34 : vector<4x32xf32>
    %36 = math.exp %35 : vector<4x32xf32>
    %cst_22 = arith.constant 1.000000e+00 : f32
    %37 = vector.broadcast %cst_22 : f32 to vector<4x32xf32>
    %38 = arith.addf %37, %36 : vector<4x32xf32>
    %39 = arith.divf %37, %38 : vector<4x32xf32>
    %40 = arith.mulf %31, %9 : vector<4x32xf32>
    %41 = arith.mulf %25, %33 : vector<4x32xf32>
    %42 = arith.addf %40, %41 : vector<4x32xf32>
    %43 = math.tanh %42 : vector<4x32xf32>
    %44 = arith.mulf %39, %43 : vector<4x32xf32>
    %45 = tpu.concatenate %44, %11 in 1 : vector<4x32xf32>, vector<4x32xf32> -> vector<4x64xf32>
    %46 = arith.truncf %45 : vector<4x64xf32> to vector<4x64xbf16>
    %cst_23 = arith.constant dense<0.000000e+00> : vector<4x128xf32>
    %47 = tpu.matmul %46, %4, %cst_23 {dimension_numbers = #tpu.dot_dimension_numbers<[1], [0], [0], [1], [0, 0, 1, 1], [], []>} : vector<4x64xbf16>, vector<64x128xbf16>, vector<4x128xf32> -> vector<4x128xf32>
    %48 = vector.broadcast %5 : vector<1x128xf32> to vector<4x128xf32>
    %49 = arith.addf %47, %48 : vector<4x128xf32>
    %50 = vector.extract_strided_slice %49 {offsets = [0, 0], sizes = [4, 32], strides = [1, 1]} : vector<4x128xf32> to vector<4x32xf32>
    %51 = arith.negf %50 : vector<4x32xf32>
    %52 = math.exp %51 : vector<4x32xf32>
    %cst_24 = arith.constant 1.000000e+00 : f32
    %53 = vector.broadcast %cst_24 : f32 to vector<4x32xf32>
    %54 = arith.addf %53, %52 : vector<4x32xf32>
    %55 = arith.divf %53, %54 : vector<4x32xf32>
    %56 = vector.extract_strided_slice %49 {offsets = [0, 32], sizes = [4, 32], strides = [1, 1]} : vector<4x128xf32> to vector<4x32xf32>
    %57 = arith.negf %56 : vector<4x32xf32>
    %58 = math.exp %57 : vector<4x32xf32>
    %cst_25 = arith.constant 1.000000e+00 : f32
    %59 = vector.broadcast %cst_25 : f32 to vector<4x32xf32>
    %60 = arith.addf %59, %58 : vector<4x32xf32>
    %61 = arith.divf %59, %60 : vector<4x32xf32>
    %62 = vector.extract_strided_slice %49 {offsets = [0, 64], sizes = [4, 32], strides = [1, 1]} : vector<4x128xf32> to vector<4x32xf32>
    %63 = math.tanh %62 : vector<4x32xf32>
    %64 = vector.extract_strided_slice %49 {offsets = [0, 96], sizes = [4, 32], strides = [1, 1]} : vector<4x128xf32> to vector<4x32xf32>
    %65 = arith.negf %64 : vector<4x32xf32>
    %66 = math.exp %65 : vector<4x32xf32>
    %cst_26 = arith.constant 1.000000e+00 : f32
    %67 = vector.broadcast %cst_26 : f32 to vector<4x32xf32>
    %68 = arith.addf %67, %66 : vector<4x32xf32>
    %69 = arith.divf %67, %68 : vector<4x32xf32>
    %70 = arith.mulf %61, %13 : vector<4x32xf32>
    %71 = arith.mulf %55, %63 : vector<4x32xf32>
    %72 = arith.addf %70, %71 : vector<4x32xf32>
    %73 = math.tanh %72 : vector<4x32xf32>
    %74 = arith.mulf %69, %73 : vector<4x32xf32>
    %75 = arith.index_cast %c0_i32_17 : i32 to index
    %c0_27 = arith.constant 0 : index
    %c0_28 = arith.constant 0 : index
    %76 = vector.load %arg6[%75, %c0_27, %c0_28] : memref<8x4x32xf32, #tpu.memory_space<vmem>>, vector<1x4x32xf32>
    %77 = vector.shape_cast %76 : vector<1x4x32xf32> to vector<4x32xf32>
    %78 = vector.shape_cast %74 : vector<4x32xf32> to vector<1x4x32xf32>
    tpu.vector_store %arg6[%75, %c0_27, %c0_28], %78 {strides = array<i32>} : memref<8x4x32xf32, #tpu.memory_space<vmem>>, vector<1x4x32xf32>,
    %c1_i32 = arith.constant 1 : i32
    %79 = arith.index_cast %c1_i32 : i32 to index
    %c0_29 = arith.constant 0 : index
    %c0_30 = arith.constant 0 : index
    %80 = vector.load %arg2[%79, %c0_29, %c0_30] : memref<8x4x128xf32, #tpu.memory_space<vmem>>, vector<1x4x128xf32>
    %81 = vector.shape_cast %80 : vector<1x4x128xf32> to vector<4x128xf32>
    %82 = arith.truncf %44 : vector<4x32xf32> to vector<4x32xbf16>
    %cst_31 = arith.constant dense<0.000000e+00> : vector<4x128xf32>
    %83 = tpu.matmul %82, %3, %cst_31 {dimension_numbers = #tpu.dot_dimension_numbers<[1], [0], [0], [1], [0, 0, 1, 1], [], []>} : vector<4x32xbf16>, vector<32x128xbf16>, vector<4x128xf32> -> vector<4x128xf32>
    %84 = arith.addf %81, %83 : vector<4x128xf32>
    %85 = vector.extract_strided_slice %84 {offsets = [0, 0], sizes = [4, 32], strides = [1, 1]} : vector<4x128xf32> to vector<4x32xf32>
    %86 = arith.negf %85 : vector<4x32xf32>
    %87 = math.exp %86 : vector<4x32xf32>
    %cst_32 = arith.constant 1.000000e+00 : f32
    %88 = vector.broadcast %cst_32 : f32 to vector<4x32xf32>
    %89 = arith.addf %88, %87 : vector<4x32xf32>
    %90 = arith.divf %88, %89 : vector<4x32xf32>
    %91 = vector.extract_strided_slice %84 {offsets = [0, 32], sizes = [4, 32], strides = [1, 1]} : vector<4x128xf32> to vector<4x32xf32>
    %92 = arith.negf %91 : vector<4x32xf32>
    %93 = math.exp %92 : vector<4x32xf32>
    %cst_33 = arith.constant 1.000000e+00 : f32
    %94 = vector.broadcast %cst_33 : f32 to vector<4x32xf32>
    %95 = arith.addf %94, %93 : vector<4x32xf32>
    %96 = arith.divf %94, %95 : vector<4x32xf32>
    %97 = vector.extract_strided_slice %84 {offsets = [0, 64], sizes = [4, 32], strides = [1, 1]} : vector<4x128xf32> to vector<4x32xf32>
    %98 = math.tanh %97 : vector<4x32xf32>
    %99 = vector.extract_strided_slice %84 {offsets = [0, 96], sizes = [4, 32], strides = [1, 1]} : vector<4x128xf32> to vector<4x32xf32>
    %100 = arith.negf %99 : vector<4x32xf32>
    %101 = math.exp %100 : vector<4x32xf32>
    %cst_34 = arith.constant 1.000000e+00 : f32
    %102 = vector.broadcast %cst_34 : f32 to vector<4x32xf32>
    %103 = arith.addf %102, %101 : vector<4x32xf32>
    %104 = arith.divf %102, %103 : vector<4x32xf32>
    %105 = arith.mulf %96, %42 : vector<4x32xf32>
    %106 = arith.mulf %90, %98 : vector<4x32xf32>
    %107 = arith.addf %105, %106 : vector<4x32xf32>
    %108 = math.tanh %107 : vector<4x32xf32>
    %109 = arith.mulf %104, %108 : vector<4x32xf32>
    %110 = tpu.concatenate %109, %74 in 1 : vector<4x32xf32>, vector<4x32xf32> -> vector<4x64xf32>
    %111 = arith.truncf %110 : vector<4x64xf32> to vector<4x64xbf16>
    %cst_35 = arith.constant dense<0.000000e+00> : vector<4x128xf32>
    %112 = tpu.matmul %111, %4, %cst_35 {dimension_numbers = #tpu.dot_dimension_numbers<[1], [0], [0], [1], [0, 0, 1, 1], [], []>} : vector<4x64xbf16>, vector<64x128xbf16>, vector<4x128xf32> -> vector<4x128xf32>
    %113 = vector.broadcast %5 : vector<1x128xf32> to vector<4x128xf32>
    %114 = arith.addf %112, %113 : vector<4x128xf32>
    %115 = vector.extract_strided_slice %114 {offsets = [0, 0], sizes = [4, 32], strides = [1, 1]} : vector<4x128xf32> to vector<4x32xf32>
    %116 = arith.negf %115 : vector<4x32xf32>
    %117 = math.exp %116 : vector<4x32xf32>
    %cst_36 = arith.constant 1.000000e+00 : f32
    %118 = vector.broadcast %cst_36 : f32 to vector<4x32xf32>
    %119 = arith.addf %118, %117 : vector<4x32xf32>
    %120 = arith.divf %118, %119 : vector<4x32xf32>
    %121 = vector.extract_strided_slice %114 {offsets = [0, 32], sizes = [4, 32], strides = [1, 1]} : vector<4x128xf32> to vector<4x32xf32>
    %122 = arith.negf %121 : vector<4x32xf32>
    %123 = math.exp %122 : vector<4x32xf32>
    %cst_37 = arith.constant 1.000000e+00 : f32
    %124 = vector.broadcast %cst_37 : f32 to vector<4x32xf32>
    %125 = arith.addf %124, %123 : vector<4x32xf32>
    %126 = arith.divf %124, %125 : vector<4x32xf32>
    %127 = vector.extract_strided_slice %114 {offsets = [0, 64], sizes = [4, 32], strides = [1, 1]} : vector<4x128xf32> to vector<4x32xf32>
    %128 = math.tanh %127 : vector<4x32xf32>
    %129 = vector.extract_strided_slice %114 {offsets = [0, 96], sizes = [4, 32], strides = [1, 1]} : vector<4x128xf32> to vector<4x32xf32>
    %130 = arith.negf %129 : vector<4x32xf32>
    %131 = math.exp %130 : vector<4x32xf32>
    %cst_38 = arith.constant 1.000000e+00 : f32
    %132 = vector.broadcast %cst_38 : f32 to vector<4x32xf32>
    %133 = arith.addf %132, %131 : vector<4x32xf32>
    %134 = arith.divf %132, %133 : vector<4x32xf32>
    %135 = arith.mulf %126, %72 : vector<4x32xf32>
    %136 = arith.mulf %120, %128 : vector<4x32xf32>
    %137 = arith.addf %135, %136 : vector<4x32xf32>
    %138 = math.tanh %137 : vector<4x32xf32>
    %139 = arith.mulf %134, %138 : vector<4x32xf32>
    %140 = arith.index_cast %c1_i32 : i32 to index
    %c0_39 = arith.constant 0 : index
    %c0_40 = arith.constant 0 : index
    %141 = vector.load %arg6[%140, %c0_39, %c0_40] : memref<8x4x32xf32, #tpu.memory_space<vmem>>, vector<1x4x32xf32>
    %142 = vector.shape_cast %141 : vector<1x4x32xf32> to vector<4x32xf32>
    %143 = vector.shape_cast %139 : vector<4x32xf32> to vector<1x4x32xf32>
    tpu.vector_store %arg6[%140, %c0_39, %c0_40], %143 {strides = array<i32>} : memref<8x4x32xf32, #tpu.memory_space<vmem>>, vector<1x4x32xf32>,
    %c2_i32 = arith.constant 2 : i32
    %144 = arith.index_cast %c2_i32 : i32 to index
    %c0_41 = arith.constant 0 : index
    %c0_42 = arith.constant 0 : index
    %145 = vector.load %arg2[%144, %c0_41, %c0_42] : memref<8x4x128xf32, #tpu.memory_space<vmem>>, vector<1x4x128xf32>
    %146 = vector.shape_cast %145 : vector<1x4x128xf32> to vector<4x128xf32>
    %147 = arith.truncf %109 : vector<4x32xf32> to vector<4x32xbf16>
    %cst_43 = arith.constant dense<0.000000e+00> : vector<4x128xf32>
    %148 = tpu.matmul %147, %3, %cst_43 {dimension_numbers = #tpu.dot_dimension_numbers<[1], [0], [0], [1], [0, 0, 1, 1], [], []>} : vector<4x32xbf16>, vector<32x128xbf16>, vector<4x128xf32> -> vector<4x128xf32>
    %149 = arith.addf %146, %148 : vector<4x128xf32>
    %150 = vector.extract_strided_slice %149 {offsets = [0, 0], sizes = [4, 32], strides = [1, 1]} : vector<4x128xf32> to vector<4x32xf32>
    %151 = arith.negf %150 : vector<4x32xf32>
    %152 = math.exp %151 : vector<4x32xf32>
    %cst_44 = arith.constant 1.000000e+00 : f32
    %153 = vector.broadcast %cst_44 : f32 to vector<4x32xf32>
    %154 = arith.addf %153, %152 : vector<4x32xf32>
    %155 = arith.divf %153, %154 : vector<4x32xf32>
    %156 = vector.extract_strided_slice %149 {offsets = [0, 32], sizes = [4, 32], strides = [1, 1]} : vector<4x128xf32> to vector<4x32xf32>
    %157 = arith.negf %156 : vector<4x32xf32>
    %158 = math.exp %157 : vector<4x32xf32>
    %cst_45 = arith.constant 1.000000e+00 : f32
    %159 = vector.broadcast %cst_45 : f32 to vector<4x32xf32>
    %160 = arith.addf %159, %158 : vector<4x32xf32>
    %161 = arith.divf %159, %160 : vector<4x32xf32>
    %162 = vector.extract_strided_slice %149 {offsets = [0, 64], sizes = [4, 32], strides = [1, 1]} : vector<4x128xf32> to vector<4x32xf32>
    %163 = math.tanh %162 : vector<4x32xf32>
    %164 = vector.extract_strided_slice %149 {offsets = [0, 96], sizes = [4, 32], strides = [1, 1]} : vector<4x128xf32> to vector<4x32xf32>
    %165 = arith.negf %164 : vector<4x32xf32>
    %166 = math.exp %165 : vector<4x32xf32>
    %cst_46 = arith.constant 1.000000e+00 : f32
    %167 = vector.broadcast %cst_46 : f32 to vector<4x32xf32>
    %168 = arith.addf %167, %166 : vector<4x32xf32>
    %169 = arith.divf %167, %168 : vector<4x32xf32>
    %170 = arith.mulf %161, %107 : vector<4x32xf32>
    %171 = arith.mulf %155, %163 : vector<4x32xf32>
    %172 = arith.addf %170, %171 : vector<4x32xf32>
    %173 = math.tanh %172 : vector<4x32xf32>
    %174 = arith.mulf %169, %173 : vector<4x32xf32>
    %175 = tpu.concatenate %174, %139 in 1 : vector<4x32xf32>, vector<4x32xf32> -> vector<4x64xf32>
    %176 = arith.truncf %175 : vector<4x64xf32> to vector<4x64xbf16>
    %cst_47 = arith.constant dense<0.000000e+00> : vector<4x128xf32>
    %177 = tpu.matmul %176, %4, %cst_47 {dimension_numbers = #tpu.dot_dimension_numbers<[1], [0], [0], [1], [0, 0, 1, 1], [], []>} : vector<4x64xbf16>, vector<64x128xbf16>, vector<4x128xf32> -> vector<4x128xf32>
    %178 = vector.broadcast %5 : vector<1x128xf32> to vector<4x128xf32>
    %179 = arith.addf %177, %178 : vector<4x128xf32>
    %180 = vector.extract_strided_slice %179 {offsets = [0, 0], sizes = [4, 32], strides = [1, 1]} : vector<4x128xf32> to vector<4x32xf32>
    %181 = arith.negf %180 : vector<4x32xf32>
    %182 = math.exp %181 : vector<4x32xf32>
    %cst_48 = arith.constant 1.000000e+00 : f32
    %183 = vector.broadcast %cst_48 : f32 to vector<4x32xf32>
    %184 = arith.addf %183, %182 : vector<4x32xf32>
    %185 = arith.divf %183, %184 : vector<4x32xf32>
    %186 = vector.extract_strided_slice %179 {offsets = [0, 32], sizes = [4, 32], strides = [1, 1]} : vector<4x128xf32> to vector<4x32xf32>
    %187 = arith.negf %186 : vector<4x32xf32>
    %188 = math.exp %187 : vector<4x32xf32>
    %cst_49 = arith.constant 1.000000e+00 : f32
    %189 = vector.broadcast %cst_49 : f32 to vector<4x32xf32>
    %190 = arith.addf %189, %188 : vector<4x32xf32>
    %191 = arith.divf %189, %190 : vector<4x32xf32>
    %192 = vector.extract_strided_slice %179 {offsets = [0, 64], sizes = [4, 32], strides = [1, 1]} : vector<4x128xf32> to vector<4x32xf32>
    %193 = math.tanh %192 : vector<4x32xf32>
    %194 = vector.extract_strided_slice %179 {offsets = [0, 96], sizes = [4, 32], strides = [1, 1]} : vector<4x128xf32> to vector<4x32xf32>
    %195 = arith.negf %194 : vector<4x32xf32>
    %196 = math.exp %195 : vector<4x32xf32>
    %cst_50 = arith.constant 1.000000e+00 : f32
    %197 = vector.broadcast %cst_50 : f32 to vector<4x32xf32>
    %198 = arith.addf %197, %196 : vector<4x32xf32>
    %199 = arith.divf %197, %198 : vector<4x32xf32>
    %200 = arith.mulf %191, %137 : vector<4x32xf32>
    %201 = arith.mulf %185, %193 : vector<4x32xf32>
    %202 = arith.addf %200, %201 : vector<4x32xf32>
    %203 = math.tanh %202 : vector<4x32xf32>
    %204 = arith.mulf %199, %203 : vector<4x32xf32>
    %205 = arith.index_cast %c2_i32 : i32 to index
    %c0_51 = arith.constant 0 : index
    %c0_52 = arith.constant 0 : index
    %206 = vector.load %arg6[%205, %c0_51, %c0_52] : memref<8x4x32xf32, #tpu.memory_space<vmem>>, vector<1x4x32xf32>
    %207 = vector.shape_cast %206 : vector<1x4x32xf32> to vector<4x32xf32>
    %208 = vector.shape_cast %204 : vector<4x32xf32> to vector<1x4x32xf32>
    tpu.vector_store %arg6[%205, %c0_51, %c0_52], %208 {strides = array<i32>} : memref<8x4x32xf32, #tpu.memory_space<vmem>>, vector<1x4x32xf32>,
    %c3_i32 = arith.constant 3 : i32
    %209 = arith.index_cast %c3_i32 : i32 to index
    %c0_53 = arith.constant 0 : index
    %c0_54 = arith.constant 0 : index
    %210 = vector.load %arg2[%209, %c0_53, %c0_54] : memref<8x4x128xf32, #tpu.memory_space<vmem>>, vector<1x4x128xf32>
    %211 = vector.shape_cast %210 : vector<1x4x128xf32> to vector<4x128xf32>
    %212 = arith.truncf %174 : vector<4x32xf32> to vector<4x32xbf16>
    %cst_55 = arith.constant dense<0.000000e+00> : vector<4x128xf32>
    %213 = tpu.matmul %212, %3, %cst_55 {dimension_numbers = #tpu.dot_dimension_numbers<[1], [0], [0], [1], [0, 0, 1, 1], [], []>} : vector<4x32xbf16>, vector<32x128xbf16>, vector<4x128xf32> -> vector<4x128xf32>
    %214 = arith.addf %211, %213 : vector<4x128xf32>
    %215 = vector.extract_strided_slice %214 {offsets = [0, 0], sizes = [4, 32], strides = [1, 1]} : vector<4x128xf32> to vector<4x32xf32>
    %216 = arith.negf %215 : vector<4x32xf32>
    %217 = math.exp %216 : vector<4x32xf32>
    %cst_56 = arith.constant 1.000000e+00 : f32
    %218 = vector.broadcast %cst_56 : f32 to vector<4x32xf32>
    %219 = arith.addf %218, %217 : vector<4x32xf32>
    %220 = arith.divf %218, %219 : vector<4x32xf32>
    %221 = vector.extract_strided_slice %214 {offsets = [0, 32], sizes = [4, 32], strides = [1, 1]} : vector<4x128xf32> to vector<4x32xf32>
    %222 = arith.negf %221 : vector<4x32xf32>
    %223 = math.exp %222 : vector<4x32xf32>
    %cst_57 = arith.constant 1.000000e+00 : f32
    %224 = vector.broadcast %cst_57 : f32 to vector<4x32xf32>
    %225 = arith.addf %224, %223 : vector<4x32xf32>
    %226 = arith.divf %224, %225 : vector<4x32xf32>
    %227 = vector.extract_strided_slice %214 {offsets = [0, 64], sizes = [4, 32], strides = [1, 1]} : vector<4x128xf32> to vector<4x32xf32>
    %228 = math.tanh %227 : vector<4x32xf32>
    %229 = vector.extract_strided_slice %214 {offsets = [0, 96], sizes = [4, 32], strides = [1, 1]} : vector<4x128xf32> to vector<4x32xf32>
    %230 = arith.negf %229 : vector<4x32xf32>
    %231 = math.exp %230 : vector<4x32xf32>
    %cst_58 = arith.constant 1.000000e+00 : f32
    %232 = vector.broadcast %cst_58 : f32 to vector<4x32xf32>
    %233 = arith.addf %232, %231 : vector<4x32xf32>
    %234 = arith.divf %232, %233 : vector<4x32xf32>
    %235 = arith.mulf %226, %172 : vector<4x32xf32>
    %236 = arith.mulf %220, %228 : vector<4x32xf32>
    %237 = arith.addf %235, %236 : vector<4x32xf32>
    %238 = math.tanh %237 : vector<4x32xf32>
    %239 = arith.mulf %234, %238 : vector<4x32xf32>
    %240 = tpu.concatenate %239, %204 in 1 : vector<4x32xf32>, vector<4x32xf32> -> vector<4x64xf32>
    %241 = arith.truncf %240 : vector<4x64xf32> to vector<4x64xbf16>
    %cst_59 = arith.constant dense<0.000000e+00> : vector<4x128xf32>
    %242 = tpu.matmul %241, %4, %cst_59 {dimension_numbers = #tpu.dot_dimension_numbers<[1], [0], [0], [1], [0, 0, 1, 1], [], []>} : vector<4x64xbf16>, vector<64x128xbf16>, vector<4x128xf32> -> vector<4x128xf32>
    %243 = vector.broadcast %5 : vector<1x128xf32> to vector<4x128xf32>
    %244 = arith.addf %242, %243 : vector<4x128xf32>
    %245 = vector.extract_strided_slice %244 {offsets = [0, 0], sizes = [4, 32], strides = [1, 1]} : vector<4x128xf32> to vector<4x32xf32>
    %246 = arith.negf %245 : vector<4x32xf32>
    %247 = math.exp %246 : vector<4x32xf32>
    %cst_60 = arith.constant 1.000000e+00 : f32
    %248 = vector.broadcast %cst_60 : f32 to vector<4x32xf32>
    %249 = arith.addf %248, %247 : vector<4x32xf32>
    %250 = arith.divf %248, %249 : vector<4x32xf32>
    %251 = vector.extract_strided_slice %244 {offsets = [0, 32], sizes = [4, 32], strides = [1, 1]} : vector<4x128xf32> to vector<4x32xf32>
    %252 = arith.negf %251 : vector<4x32xf32>
    %253 = math.exp %252 : vector<4x32xf32>
    %cst_61 = arith.constant 1.000000e+00 : f32
    %254 = vector.broadcast %cst_61 : f32 to vector<4x32xf32>
    %255 = arith.addf %254, %253 : vector<4x32xf32>
    %256 = arith.divf %254, %255 : vector<4x32xf32>
    %257 = vector.extract_strided_slice %244 {offsets = [0, 64], sizes = [4, 32], strides = [1, 1]} : vector<4x128xf32> to vector<4x32xf32>
    %258 = math.tanh %257 : vector<4x32xf32>
    %259 = vector.extract_strided_slice %244 {offsets = [0, 96], sizes = [4, 32], strides = [1, 1]} : vector<4x128xf32> to vector<4x32xf32>
    %260 = arith.negf %259 : vector<4x32xf32>
    %261 = math.exp %260 : vector<4x32xf32>
    %cst_62 = arith.constant 1.000000e+00 : f32
    %262 = vector.broadcast %cst_62 : f32 to vector<4x32xf32>
    %263 = arith.addf %262, %261 : vector<4x32xf32>
    %264 = arith.divf %262, %263 : vector<4x32xf32>
    %265 = arith.mulf %256, %202 : vector<4x32xf32>
    %266 = arith.mulf %250, %258 : vector<4x32xf32>
    %267 = arith.addf %265, %266 : vector<4x32xf32>
    %268 = math.tanh %267 : vector<4x32xf32>
    %269 = arith.mulf %264, %268 : vector<4x32xf32>
    %270 = arith.index_cast %c3_i32 : i32 to index
    %c0_63 = arith.constant 0 : index
    %c0_64 = arith.constant 0 : index
    %271 = vector.load %arg6[%270, %c0_63, %c0_64] : memref<8x4x32xf32, #tpu.memory_space<vmem>>, vector<1x4x32xf32>
    %272 = vector.shape_cast %271 : vector<1x4x32xf32> to vector<4x32xf32>
    %273 = vector.shape_cast %269 : vector<4x32xf32> to vector<1x4x32xf32>
    tpu.vector_store %arg6[%270, %c0_63, %c0_64], %273 {strides = array<i32>} : memref<8x4x32xf32, #tpu.memory_space<vmem>>, vector<1x4x32xf32>,
    %c4_i32 = arith.constant 4 : i32
    %274 = arith.index_cast %c4_i32 : i32 to index
    %c0_65 = arith.constant 0 : index
    %c0_66 = arith.constant 0 : index
    %275 = vector.load %arg2[%274, %c0_65, %c0_66] : memref<8x4x128xf32, #tpu.memory_space<vmem>>, vector<1x4x128xf32>
    %276 = vector.shape_cast %275 : vector<1x4x128xf32> to vector<4x128xf32>
    %277 = arith.truncf %239 : vector<4x32xf32> to vector<4x32xbf16>
    %cst_67 = arith.constant dense<0.000000e+00> : vector<4x128xf32>
    %278 = tpu.matmul %277, %3, %cst_67 {dimension_numbers = #tpu.dot_dimension_numbers<[1], [0], [0], [1], [0, 0, 1, 1], [], []>} : vector<4x32xbf16>, vector<32x128xbf16>, vector<4x128xf32> -> vector<4x128xf32>
    %279 = arith.addf %276, %278 : vector<4x128xf32>
    %280 = vector.extract_strided_slice %279 {offsets = [0, 0], sizes = [4, 32], strides = [1, 1]} : vector<4x128xf32> to vector<4x32xf32>
    %281 = arith.negf %280 : vector<4x32xf32>
    %282 = math.exp %281 : vector<4x32xf32>
    %cst_68 = arith.constant 1.000000e+00 : f32
    %283 = vector.broadcast %cst_68 : f32 to vector<4x32xf32>
    %284 = arith.addf %283, %282 : vector<4x32xf32>
    %285 = arith.divf %283, %284 : vector<4x32xf32>
    %286 = vector.extract_strided_slice %279 {offsets = [0, 32], sizes = [4, 32], strides = [1, 1]} : vector<4x128xf32> to vector<4x32xf32>
    %287 = arith.negf %286 : vector<4x32xf32>
    %288 = math.exp %287 : vector<4x32xf32>
    %cst_69 = arith.constant 1.000000e+00 : f32
    %289 = vector.broadcast %cst_69 : f32 to vector<4x32xf32>
    %290 = arith.addf %289, %288 : vector<4x32xf32>
    %291 = arith.divf %289, %290 : vector<4x32xf32>
    %292 = vector.extract_strided_slice %279 {offsets = [0, 64], sizes = [4, 32], strides = [1, 1]} : vector<4x128xf32> to vector<4x32xf32>
    %293 = math.tanh %292 : vector<4x32xf32>
    %294 = vector.extract_strided_slice %279 {offsets = [0, 96], sizes = [4, 32], strides = [1, 1]} : vector<4x128xf32> to vector<4x32xf32>
    %295 = arith.negf %294 : vector<4x32xf32>
    %296 = math.exp %295 : vector<4x32xf32>
    %cst_70 = arith.constant 1.000000e+00 : f32
    %297 = vector.broadcast %cst_70 : f32 to vector<4x32xf32>
    %298 = arith.addf %297, %296 : vector<4x32xf32>
    %299 = arith.divf %297, %298 : vector<4x32xf32>
    %300 = arith.mulf %291, %237 : vector<4x32xf32>
    %301 = arith.mulf %285, %293 : vector<4x32xf32>
    %302 = arith.addf %300, %301 : vector<4x32xf32>
    %303 = math.tanh %302 : vector<4x32xf32>
    %304 = arith.mulf %299, %303 : vector<4x32xf32>
    %305 = tpu.concatenate %304, %269 in 1 : vector<4x32xf32>, vector<4x32xf32> -> vector<4x64xf32>
    %306 = arith.truncf %305 : vector<4x64xf32> to vector<4x64xbf16>
    %cst_71 = arith.constant dense<0.000000e+00> : vector<4x128xf32>
    %307 = tpu.matmul %306, %4, %cst_71 {dimension_numbers = #tpu.dot_dimension_numbers<[1], [0], [0], [1], [0, 0, 1, 1], [], []>} : vector<4x64xbf16>, vector<64x128xbf16>, vector<4x128xf32> -> vector<4x128xf32>
    %308 = vector.broadcast %5 : vector<1x128xf32> to vector<4x128xf32>
    %309 = arith.addf %307, %308 : vector<4x128xf32>
    %310 = vector.extract_strided_slice %309 {offsets = [0, 0], sizes = [4, 32], strides = [1, 1]} : vector<4x128xf32> to vector<4x32xf32>
    %311 = arith.negf %310 : vector<4x32xf32>
    %312 = math.exp %311 : vector<4x32xf32>
    %cst_72 = arith.constant 1.000000e+00 : f32
    %313 = vector.broadcast %cst_72 : f32 to vector<4x32xf32>
    %314 = arith.addf %313, %312 : vector<4x32xf32>
    %315 = arith.divf %313, %314 : vector<4x32xf32>
    %316 = vector.extract_strided_slice %309 {offsets = [0, 32], sizes = [4, 32], strides = [1, 1]} : vector<4x128xf32> to vector<4x32xf32>
    %317 = arith.negf %316 : vector<4x32xf32>
    %318 = math.exp %317 : vector<4x32xf32>
    %cst_73 = arith.constant 1.000000e+00 : f32
    %319 = vector.broadcast %cst_73 : f32 to vector<4x32xf32>
    %320 = arith.addf %319, %318 : vector<4x32xf32>
    %321 = arith.divf %319, %320 : vector<4x32xf32>
    %322 = vector.extract_strided_slice %309 {offsets = [0, 64], sizes = [4, 32], strides = [1, 1]} : vector<4x128xf32> to vector<4x32xf32>
    %323 = math.tanh %322 : vector<4x32xf32>
    %324 = vector.extract_strided_slice %309 {offsets = [0, 96], sizes = [4, 32], strides = [1, 1]} : vector<4x128xf32> to vector<4x32xf32>
    %325 = arith.negf %324 : vector<4x32xf32>
    %326 = math.exp %325 : vector<4x32xf32>
    %cst_74 = arith.constant 1.000000e+00 : f32
    %327 = vector.broadcast %cst_74 : f32 to vector<4x32xf32>
    %328 = arith.addf %327, %326 : vector<4x32xf32>
    %329 = arith.divf %327, %328 : vector<4x32xf32>
    %330 = arith.mulf %321, %267 : vector<4x32xf32>
    %331 = arith.mulf %315, %323 : vector<4x32xf32>
    %332 = arith.addf %330, %331 : vector<4x32xf32>
    %333 = math.tanh %332 : vector<4x32xf32>
    %334 = arith.mulf %329, %333 : vector<4x32xf32>
    %335 = arith.index_cast %c4_i32 : i32 to index
    %c0_75 = arith.constant 0 : index
    %c0_76 = arith.constant 0 : index
    %336 = vector.load %arg6[%335, %c0_75, %c0_76] : memref<8x4x32xf32, #tpu.memory_space<vmem>>, vector<1x4x32xf32>
    %337 = vector.shape_cast %336 : vector<1x4x32xf32> to vector<4x32xf32>
    %338 = vector.shape_cast %334 : vector<4x32xf32> to vector<1x4x32xf32>
    tpu.vector_store %arg6[%335, %c0_75, %c0_76], %338 {strides = array<i32>} : memref<8x4x32xf32, #tpu.memory_space<vmem>>, vector<1x4x32xf32>,
    %c5_i32 = arith.constant 5 : i32
    %339 = arith.index_cast %c5_i32 : i32 to index
    %c0_77 = arith.constant 0 : index
    %c0_78 = arith.constant 0 : index
    %340 = vector.load %arg2[%339, %c0_77, %c0_78] : memref<8x4x128xf32, #tpu.memory_space<vmem>>, vector<1x4x128xf32>
    %341 = vector.shape_cast %340 : vector<1x4x128xf32> to vector<4x128xf32>
    %342 = arith.truncf %304 : vector<4x32xf32> to vector<4x32xbf16>
    %cst_79 = arith.constant dense<0.000000e+00> : vector<4x128xf32>
    %343 = tpu.matmul %342, %3, %cst_79 {dimension_numbers = #tpu.dot_dimension_numbers<[1], [0], [0], [1], [0, 0, 1, 1], [], []>} : vector<4x32xbf16>, vector<32x128xbf16>, vector<4x128xf32> -> vector<4x128xf32>
    %344 = arith.addf %341, %343 : vector<4x128xf32>
    %345 = vector.extract_strided_slice %344 {offsets = [0, 0], sizes = [4, 32], strides = [1, 1]} : vector<4x128xf32> to vector<4x32xf32>
    %346 = arith.negf %345 : vector<4x32xf32>
    %347 = math.exp %346 : vector<4x32xf32>
    %cst_80 = arith.constant 1.000000e+00 : f32
    %348 = vector.broadcast %cst_80 : f32 to vector<4x32xf32>
    %349 = arith.addf %348, %347 : vector<4x32xf32>
    %350 = arith.divf %348, %349 : vector<4x32xf32>
    %351 = vector.extract_strided_slice %344 {offsets = [0, 32], sizes = [4, 32], strides = [1, 1]} : vector<4x128xf32> to vector<4x32xf32>
    %352 = arith.negf %351 : vector<4x32xf32>
    %353 = math.exp %352 : vector<4x32xf32>
    %cst_81 = arith.constant 1.000000e+00 : f32
    %354 = vector.broadcast %cst_81 : f32 to vector<4x32xf32>
    %355 = arith.addf %354, %353 : vector<4x32xf32>
    %356 = arith.divf %354, %355 : vector<4x32xf32>
    %357 = vector.extract_strided_slice %344 {offsets = [0, 64], sizes = [4, 32], strides = [1, 1]} : vector<4x128xf32> to vector<4x32xf32>
    %358 = math.tanh %357 : vector<4x32xf32>
    %359 = vector.extract_strided_slice %344 {offsets = [0, 96], sizes = [4, 32], strides = [1, 1]} : vector<4x128xf32> to vector<4x32xf32>
    %360 = arith.negf %359 : vector<4x32xf32>
    %361 = math.exp %360 : vector<4x32xf32>
    %cst_82 = arith.constant 1.000000e+00 : f32
    %362 = vector.broadcast %cst_82 : f32 to vector<4x32xf32>
    %363 = arith.addf %362, %361 : vector<4x32xf32>
    %364 = arith.divf %362, %363 : vector<4x32xf32>
    %365 = arith.mulf %356, %302 : vector<4x32xf32>
    %366 = arith.mulf %350, %358 : vector<4x32xf32>
    %367 = arith.addf %365, %366 : vector<4x32xf32>
    %368 = math.tanh %367 : vector<4x32xf32>
    %369 = arith.mulf %364, %368 : vector<4x32xf32>
    %370 = tpu.concatenate %369, %334 in 1 : vector<4x32xf32>, vector<4x32xf32> -> vector<4x64xf32>
    %371 = arith.truncf %370 : vector<4x64xf32> to vector<4x64xbf16>
    %cst_83 = arith.constant dense<0.000000e+00> : vector<4x128xf32>
    %372 = tpu.matmul %371, %4, %cst_83 {dimension_numbers = #tpu.dot_dimension_numbers<[1], [0], [0], [1], [0, 0, 1, 1], [], []>} : vector<4x64xbf16>, vector<64x128xbf16>, vector<4x128xf32> -> vector<4x128xf32>
    %373 = vector.broadcast %5 : vector<1x128xf32> to vector<4x128xf32>
    %374 = arith.addf %372, %373 : vector<4x128xf32>
    %375 = vector.extract_strided_slice %374 {offsets = [0, 0], sizes = [4, 32], strides = [1, 1]} : vector<4x128xf32> to vector<4x32xf32>
    %376 = arith.negf %375 : vector<4x32xf32>
    %377 = math.exp %376 : vector<4x32xf32>
    %cst_84 = arith.constant 1.000000e+00 : f32
    %378 = vector.broadcast %cst_84 : f32 to vector<4x32xf32>
    %379 = arith.addf %378, %377 : vector<4x32xf32>
    %380 = arith.divf %378, %379 : vector<4x32xf32>
    %381 = vector.extract_strided_slice %374 {offsets = [0, 32], sizes = [4, 32], strides = [1, 1]} : vector<4x128xf32> to vector<4x32xf32>
    %382 = arith.negf %381 : vector<4x32xf32>
    %383 = math.exp %382 : vector<4x32xf32>
    %cst_85 = arith.constant 1.000000e+00 : f32
    %384 = vector.broadcast %cst_85 : f32 to vector<4x32xf32>
    %385 = arith.addf %384, %383 : vector<4x32xf32>
    %386 = arith.divf %384, %385 : vector<4x32xf32>
    %387 = vector.extract_strided_slice %374 {offsets = [0, 64], sizes = [4, 32], strides = [1, 1]} : vector<4x128xf32> to vector<4x32xf32>
    %388 = math.tanh %387 : vector<4x32xf32>
    %389 = vector.extract_strided_slice %374 {offsets = [0, 96], sizes = [4, 32], strides = [1, 1]} : vector<4x128xf32> to vector<4x32xf32>
    %390 = arith.negf %389 : vector<4x32xf32>
    %391 = math.exp %390 : vector<4x32xf32>
    %cst_86 = arith.constant 1.000000e+00 : f32
    %392 = vector.broadcast %cst_86 : f32 to vector<4x32xf32>
    %393 = arith.addf %392, %391 : vector<4x32xf32>
    %394 = arith.divf %392, %393 : vector<4x32xf32>
    %395 = arith.mulf %386, %332 : vector<4x32xf32>
    %396 = arith.mulf %380, %388 : vector<4x32xf32>
    %397 = arith.addf %395, %396 : vector<4x32xf32>
    %398 = math.tanh %397 : vector<4x32xf32>
    %399 = arith.mulf %394, %398 : vector<4x32xf32>
    %400 = arith.index_cast %c5_i32 : i32 to index
    %c0_87 = arith.constant 0 : index
    %c0_88 = arith.constant 0 : index
    %401 = vector.load %arg6[%400, %c0_87, %c0_88] : memref<8x4x32xf32, #tpu.memory_space<vmem>>, vector<1x4x32xf32>
    %402 = vector.shape_cast %401 : vector<1x4x32xf32> to vector<4x32xf32>
    %403 = vector.shape_cast %399 : vector<4x32xf32> to vector<1x4x32xf32>
    tpu.vector_store %arg6[%400, %c0_87, %c0_88], %403 {strides = array<i32>} : memref<8x4x32xf32, #tpu.memory_space<vmem>>, vector<1x4x32xf32>,
    %c6_i32 = arith.constant 6 : i32
    %404 = arith.index_cast %c6_i32 : i32 to index
    %c0_89 = arith.constant 0 : index
    %c0_90 = arith.constant 0 : index
    %405 = vector.load %arg2[%404, %c0_89, %c0_90] : memref<8x4x128xf32, #tpu.memory_space<vmem>>, vector<1x4x128xf32>
    %406 = vector.shape_cast %405 : vector<1x4x128xf32> to vector<4x128xf32>
    %407 = arith.truncf %369 : vector<4x32xf32> to vector<4x32xbf16>
    %cst_91 = arith.constant dense<0.000000e+00> : vector<4x128xf32>
    %408 = tpu.matmul %407, %3, %cst_91 {dimension_numbers = #tpu.dot_dimension_numbers<[1], [0], [0], [1], [0, 0, 1, 1], [], []>} : vector<4x32xbf16>, vector<32x128xbf16>, vector<4x128xf32> -> vector<4x128xf32>
    %409 = arith.addf %406, %408 : vector<4x128xf32>
    %410 = vector.extract_strided_slice %409 {offsets = [0, 0], sizes = [4, 32], strides = [1, 1]} : vector<4x128xf32> to vector<4x32xf32>
    %411 = arith.negf %410 : vector<4x32xf32>
    %412 = math.exp %411 : vector<4x32xf32>
    %cst_92 = arith.constant 1.000000e+00 : f32
    %413 = vector.broadcast %cst_92 : f32 to vector<4x32xf32>
    %414 = arith.addf %413, %412 : vector<4x32xf32>
    %415 = arith.divf %413, %414 : vector<4x32xf32>
    %416 = vector.extract_strided_slice %409 {offsets = [0, 32], sizes = [4, 32], strides = [1, 1]} : vector<4x128xf32> to vector<4x32xf32>
    %417 = arith.negf %416 : vector<4x32xf32>
    %418 = math.exp %417 : vector<4x32xf32>
    %cst_93 = arith.constant 1.000000e+00 : f32
    %419 = vector.broadcast %cst_93 : f32 to vector<4x32xf32>
    %420 = arith.addf %419, %418 : vector<4x32xf32>
    %421 = arith.divf %419, %420 : vector<4x32xf32>
    %422 = vector.extract_strided_slice %409 {offsets = [0, 64], sizes = [4, 32], strides = [1, 1]} : vector<4x128xf32> to vector<4x32xf32>
    %423 = math.tanh %422 : vector<4x32xf32>
    %424 = vector.extract_strided_slice %409 {offsets = [0, 96], sizes = [4, 32], strides = [1, 1]} : vector<4x128xf32> to vector<4x32xf32>
    %425 = arith.negf %424 : vector<4x32xf32>
    %426 = math.exp %425 : vector<4x32xf32>
    %cst_94 = arith.constant 1.000000e+00 : f32
    %427 = vector.broadcast %cst_94 : f32 to vector<4x32xf32>
    %428 = arith.addf %427, %426 : vector<4x32xf32>
    %429 = arith.divf %427, %428 : vector<4x32xf32>
    %430 = arith.mulf %421, %367 : vector<4x32xf32>
    %431 = arith.mulf %415, %423 : vector<4x32xf32>
    %432 = arith.addf %430, %431 : vector<4x32xf32>
    %433 = math.tanh %432 : vector<4x32xf32>
    %434 = arith.mulf %429, %433 : vector<4x32xf32>
    %435 = tpu.concatenate %434, %399 in 1 : vector<4x32xf32>, vector<4x32xf32> -> vector<4x64xf32>
    %436 = arith.truncf %435 : vector<4x64xf32> to vector<4x64xbf16>
    %cst_95 = arith.constant dense<0.000000e+00> : vector<4x128xf32>
    %437 = tpu.matmul %436, %4, %cst_95 {dimension_numbers = #tpu.dot_dimension_numbers<[1], [0], [0], [1], [0, 0, 1, 1], [], []>} : vector<4x64xbf16>, vector<64x128xbf16>, vector<4x128xf32> -> vector<4x128xf32>
    %438 = vector.broadcast %5 : vector<1x128xf32> to vector<4x128xf32>
    %439 = arith.addf %437, %438 : vector<4x128xf32>
    %440 = vector.extract_strided_slice %439 {offsets = [0, 0], sizes = [4, 32], strides = [1, 1]} : vector<4x128xf32> to vector<4x32xf32>
    %441 = arith.negf %440 : vector<4x32xf32>
    %442 = math.exp %441 : vector<4x32xf32>
    %cst_96 = arith.constant 1.000000e+00 : f32
    %443 = vector.broadcast %cst_96 : f32 to vector<4x32xf32>
    %444 = arith.addf %443, %442 : vector<4x32xf32>
    %445 = arith.divf %443, %444 : vector<4x32xf32>
    %446 = vector.extract_strided_slice %439 {offsets = [0, 32], sizes = [4, 32], strides = [1, 1]} : vector<4x128xf32> to vector<4x32xf32>
    %447 = arith.negf %446 : vector<4x32xf32>
    %448 = math.exp %447 : vector<4x32xf32>
    %cst_97 = arith.constant 1.000000e+00 : f32
    %449 = vector.broadcast %cst_97 : f32 to vector<4x32xf32>
    %450 = arith.addf %449, %448 : vector<4x32xf32>
    %451 = arith.divf %449, %450 : vector<4x32xf32>
    %452 = vector.extract_strided_slice %439 {offsets = [0, 64], sizes = [4, 32], strides = [1, 1]} : vector<4x128xf32> to vector<4x32xf32>
    %453 = math.tanh %452 : vector<4x32xf32>
    %454 = vector.extract_strided_slice %439 {offsets = [0, 96], sizes = [4, 32], strides = [1, 1]} : vector<4x128xf32> to vector<4x32xf32>
    %455 = arith.negf %454 : vector<4x32xf32>
    %456 = math.exp %455 : vector<4x32xf32>
    %cst_98 = arith.constant 1.000000e+00 : f32
    %457 = vector.broadcast %cst_98 : f32 to vector<4x32xf32>
    %458 = arith.addf %457, %456 : vector<4x32xf32>
    %459 = arith.divf %457, %458 : vector<4x32xf32>
    %460 = arith.mulf %451, %397 : vector<4x32xf32>
    %461 = arith.mulf %445, %453 : vector<4x32xf32>
    %462 = arith.addf %460, %461 : vector<4x32xf32>
    %463 = math.tanh %462 : vector<4x32xf32>
    %464 = arith.mulf %459, %463 : vector<4x32xf32>
    %465 = arith.index_cast %c6_i32 : i32 to index
    %c0_99 = arith.constant 0 : index
    %c0_100 = arith.constant 0 : index
    %466 = vector.load %arg6[%465, %c0_99, %c0_100] : memref<8x4x32xf32, #tpu.memory_space<vmem>>, vector<1x4x32xf32>
    %467 = vector.shape_cast %466 : vector<1x4x32xf32> to vector<4x32xf32>
    %468 = vector.shape_cast %464 : vector<4x32xf32> to vector<1x4x32xf32>
    tpu.vector_store %arg6[%465, %c0_99, %c0_100], %468 {strides = array<i32>} : memref<8x4x32xf32, #tpu.memory_space<vmem>>, vector<1x4x32xf32>,
    %c7_i32 = arith.constant 7 : i32
    %469 = arith.index_cast %c7_i32 : i32 to index
    %c0_101 = arith.constant 0 : index
    %c0_102 = arith.constant 0 : index
    %470 = vector.load %arg2[%469, %c0_101, %c0_102] : memref<8x4x128xf32, #tpu.memory_space<vmem>>, vector<1x4x128xf32>
    %471 = vector.shape_cast %470 : vector<1x4x128xf32> to vector<4x128xf32>
    %472 = arith.truncf %434 : vector<4x32xf32> to vector<4x32xbf16>
    %cst_103 = arith.constant dense<0.000000e+00> : vector<4x128xf32>
    %473 = tpu.matmul %472, %3, %cst_103 {dimension_numbers = #tpu.dot_dimension_numbers<[1], [0], [0], [1], [0, 0, 1, 1], [], []>} : vector<4x32xbf16>, vector<32x128xbf16>, vector<4x128xf32> -> vector<4x128xf32>
    %474 = arith.addf %471, %473 : vector<4x128xf32>
    %475 = vector.extract_strided_slice %474 {offsets = [0, 0], sizes = [4, 32], strides = [1, 1]} : vector<4x128xf32> to vector<4x32xf32>
    %476 = arith.negf %475 : vector<4x32xf32>
    %477 = math.exp %476 : vector<4x32xf32>
    %cst_104 = arith.constant 1.000000e+00 : f32
    %478 = vector.broadcast %cst_104 : f32 to vector<4x32xf32>
    %479 = arith.addf %478, %477 : vector<4x32xf32>
    %480 = arith.divf %478, %479 : vector<4x32xf32>
    %481 = vector.extract_strided_slice %474 {offsets = [0, 32], sizes = [4, 32], strides = [1, 1]} : vector<4x128xf32> to vector<4x32xf32>
    %482 = arith.negf %481 : vector<4x32xf32>
    %483 = math.exp %482 : vector<4x32xf32>
    %cst_105 = arith.constant 1.000000e+00 : f32
    %484 = vector.broadcast %cst_105 : f32 to vector<4x32xf32>
    %485 = arith.addf %484, %483 : vector<4x32xf32>
    %486 = arith.divf %484, %485 : vector<4x32xf32>
    %487 = vector.extract_strided_slice %474 {offsets = [0, 64], sizes = [4, 32], strides = [1, 1]} : vector<4x128xf32> to vector<4x32xf32>
    %488 = math.tanh %487 : vector<4x32xf32>
    %489 = vector.extract_strided_slice %474 {offsets = [0, 96], sizes = [4, 32], strides = [1, 1]} : vector<4x128xf32> to vector<4x32xf32>
    %490 = arith.negf %489 : vector<4x32xf32>
    %491 = math.exp %490 : vector<4x32xf32>
    %cst_106 = arith.constant 1.000000e+00 : f32
    %492 = vector.broadcast %cst_106 : f32 to vector<4x32xf32>
    %493 = arith.addf %492, %491 : vector<4x32xf32>
    %494 = arith.divf %492, %493 : vector<4x32xf32>
    %495 = arith.mulf %486, %432 : vector<4x32xf32>
    %496 = arith.mulf %480, %488 : vector<4x32xf32>
    %497 = arith.addf %495, %496 : vector<4x32xf32>
    %498 = math.tanh %497 : vector<4x32xf32>
    %499 = arith.mulf %494, %498 : vector<4x32xf32>
    %500 = tpu.concatenate %499, %464 in 1 : vector<4x32xf32>, vector<4x32xf32> -> vector<4x64xf32>
    %501 = arith.truncf %500 : vector<4x64xf32> to vector<4x64xbf16>
    %cst_107 = arith.constant dense<0.000000e+00> : vector<4x128xf32>
    %502 = tpu.matmul %501, %4, %cst_107 {dimension_numbers = #tpu.dot_dimension_numbers<[1], [0], [0], [1], [0, 0, 1, 1], [], []>} : vector<4x64xbf16>, vector<64x128xbf16>, vector<4x128xf32> -> vector<4x128xf32>
    %503 = vector.broadcast %5 : vector<1x128xf32> to vector<4x128xf32>
    %504 = arith.addf %502, %503 : vector<4x128xf32>
    %505 = vector.extract_strided_slice %504 {offsets = [0, 0], sizes = [4, 32], strides = [1, 1]} : vector<4x128xf32> to vector<4x32xf32>
    %506 = arith.negf %505 : vector<4x32xf32>
    %507 = math.exp %506 : vector<4x32xf32>
    %cst_108 = arith.constant 1.000000e+00 : f32
    %508 = vector.broadcast %cst_108 : f32 to vector<4x32xf32>
    %509 = arith.addf %508, %507 : vector<4x32xf32>
    %510 = arith.divf %508, %509 : vector<4x32xf32>
    %511 = vector.extract_strided_slice %504 {offsets = [0, 32], sizes = [4, 32], strides = [1, 1]} : vector<4x128xf32> to vector<4x32xf32>
    %512 = arith.negf %511 : vector<4x32xf32>
    %513 = math.exp %512 : vector<4x32xf32>
    %cst_109 = arith.constant 1.000000e+00 : f32
    %514 = vector.broadcast %cst_109 : f32 to vector<4x32xf32>
    %515 = arith.addf %514, %513 : vector<4x32xf32>
    %516 = arith.divf %514, %515 : vector<4x32xf32>
    %517 = vector.extract_strided_slice %504 {offsets = [0, 64], sizes = [4, 32], strides = [1, 1]} : vector<4x128xf32> to vector<4x32xf32>
    %518 = math.tanh %517 : vector<4x32xf32>
    %519 = vector.extract_strided_slice %504 {offsets = [0, 96], sizes = [4, 32], strides = [1, 1]} : vector<4x128xf32> to vector<4x32xf32>
    %520 = arith.negf %519 : vector<4x32xf32>
    %521 = math.exp %520 : vector<4x32xf32>
    %cst_110 = arith.constant 1.000000e+00 : f32
    %522 = vector.broadcast %cst_110 : f32 to vector<4x32xf32>
    %523 = arith.addf %522, %521 : vector<4x32xf32>
    %524 = arith.divf %522, %523 : vector<4x32xf32>
    %525 = arith.mulf %516, %462 : vector<4x32xf32>
    %526 = arith.mulf %510, %518 : vector<4x32xf32>
    %527 = arith.addf %525, %526 : vector<4x32xf32>
    %528 = math.tanh %527 : vector<4x32xf32>
    %529 = arith.mulf %524, %528 : vector<4x32xf32>
    %530 = arith.index_cast %c7_i32 : i32 to index
    %c0_111 = arith.constant 0 : index
    %c0_112 = arith.constant 0 : index
    %531 = vector.load %arg6[%530, %c0_111, %c0_112] : memref<8x4x32xf32, #tpu.memory_space<vmem>>, vector<1x4x32xf32>
    %532 = vector.shape_cast %531 : vector<1x4x32xf32> to vector<4x32xf32>
    %533 = vector.shape_cast %529 : vector<4x32xf32> to vector<1x4x32xf32>
    tpu.vector_store %arg6[%530, %c0_111, %c0_112], %533 {strides = array<i32>} : memref<8x4x32xf32, #tpu.memory_space<vmem>>, vector<1x4x32xf32>,
    %c8_i32 = arith.constant 8 : i32
    %c0_113 = arith.constant 0 : index
    %c0_114 = arith.constant 0 : index
    %c0_115 = arith.constant 0 : index
    %534 = vector.load %arg9[%c0_113, %c0_114, %c0_115] : memref<2x4x32xf32, #tpu.memory_space<vmem>>, vector<1x4x32xf32>
    %535 = vector.shape_cast %534 : vector<1x4x32xf32> to vector<4x32xf32>
    %536 = vector.shape_cast %499 : vector<4x32xf32> to vector<1x4x32xf32>
    tpu.vector_store %arg9[%c0_113, %c0_114, %c0_115], %536 {strides = array<i32>} : memref<2x4x32xf32, #tpu.memory_space<vmem>>, vector<1x4x32xf32>,
    %c0_116 = arith.constant 0 : index
    %c0_117 = arith.constant 0 : index
    %c0_118 = arith.constant 0 : index
    %537 = vector.load %arg10[%c0_116, %c0_117, %c0_118] : memref<2x4x32xf32, #tpu.memory_space<vmem>>, vector<1x4x32xf32>
    %538 = vector.shape_cast %537 : vector<1x4x32xf32> to vector<4x32xf32>
    %539 = vector.shape_cast %497 : vector<4x32xf32> to vector<1x4x32xf32>
    tpu.vector_store %arg10[%c0_116, %c0_117, %c0_118], %539 {strides = array<i32>} : memref<2x4x32xf32, #tpu.memory_space<vmem>>, vector<1x4x32xf32>,
    %c1_119 = arith.constant 1 : index
    %c0_120 = arith.constant 0 : index
    %c0_121 = arith.constant 0 : index
    %540 = vector.load %arg9[%c1_119, %c0_120, %c0_121] : memref<2x4x32xf32, #tpu.memory_space<vmem>>, vector<1x4x32xf32>
    %541 = vector.shape_cast %540 : vector<1x4x32xf32> to vector<4x32xf32>
    %542 = vector.shape_cast %529 : vector<4x32xf32> to vector<1x4x32xf32>
    tpu.vector_store %arg9[%c1_119, %c0_120, %c0_121], %542 {strides = array<i32>} : memref<2x4x32xf32, #tpu.memory_space<vmem>>, vector<1x4x32xf32>,
    %c1_122 = arith.constant 1 : index
    %c0_123 = arith.constant 0 : index
    %c0_124 = arith.constant 0 : index
    %543 = vector.load %arg10[%c1_122, %c0_123, %c0_124] : memref<2x4x32xf32, #tpu.memory_space<vmem>>, vector<1x4x32xf32>
    %544 = vector.shape_cast %543 : vector<1x4x32xf32> to vector<4x32xf32>
    %545 = vector.shape_cast %527 : vector<4x32xf32> to vector<1x4x32xf32>
    tpu.vector_store %arg10[%c1_122, %c0_123, %c0_124], %545 {strides = array<i32>} : memref<2x4x32xf32, #tpu.memory_space<vmem>>, vector<1x4x32xf32>,
    %c1_i32_125 = arith.constant 1 : i32
    %546 = arith.cmpi eq, %arg1, %c1_i32_125 : i32
    %547 = arith.extui %546 : i1 to i32
    %c0_i32_126 = arith.constant 0 : i32
    %548 = arith.cmpi ne, %547, %c0_i32_126 : i32
    scf.if %548 {
      %c0_127 = arith.constant 0 : index
      %c0_128 = arith.constant 0 : index
      %c0_129 = arith.constant 0 : index
      %549 = vector.load %arg7[%c0_127, %c0_128, %c0_129] : memref<2x4x32xf32, #tpu.memory_space<vmem>>, vector<1x4x32xf32>
      %550 = vector.shape_cast %549 : vector<1x4x32xf32> to vector<4x32xf32>
      %551 = vector.shape_cast %499 : vector<4x32xf32> to vector<1x4x32xf32>
      tpu.vector_store %arg7[%c0_127, %c0_128, %c0_129], %551 {strides = array<i32>} : memref<2x4x32xf32, #tpu.memory_space<vmem>>, vector<1x4x32xf32>,
      %c1_130 = arith.constant 1 : index
      %c0_131 = arith.constant 0 : index
      %c0_132 = arith.constant 0 : index
      %552 = vector.load %arg7[%c1_130, %c0_131, %c0_132] : memref<2x4x32xf32, #tpu.memory_space<vmem>>, vector<1x4x32xf32>
      %553 = vector.shape_cast %552 : vector<1x4x32xf32> to vector<4x32xf32>
      %554 = vector.shape_cast %529 : vector<4x32xf32> to vector<1x4x32xf32>
      tpu.vector_store %arg7[%c1_130, %c0_131, %c0_132], %554 {strides = array<i32>} : memref<2x4x32xf32, #tpu.memory_space<vmem>>, vector<1x4x32xf32>,
      %c0_133 = arith.constant 0 : index
      %c0_134 = arith.constant 0 : index
      %c0_135 = arith.constant 0 : index
      %555 = vector.load %arg8[%c0_133, %c0_134, %c0_135] : memref<2x4x32xf32, #tpu.memory_space<vmem>>, vector<1x4x32xf32>
      %556 = vector.shape_cast %555 : vector<1x4x32xf32> to vector<4x32xf32>
      %557 = vector.shape_cast %497 : vector<4x32xf32> to vector<1x4x32xf32>
      tpu.vector_store %arg8[%c0_133, %c0_134, %c0_135], %557 {strides = array<i32>} : memref<2x4x32xf32, #tpu.memory_space<vmem>>, vector<1x4x32xf32>,
      %c1_136 = arith.constant 1 : index
      %c0_137 = arith.constant 0 : index
      %c0_138 = arith.constant 0 : index
      %558 = vector.load %arg8[%c1_136, %c0_137, %c0_138] : memref<2x4x32xf32, #tpu.memory_space<vmem>>, vector<1x4x32xf32>
      %559 = vector.shape_cast %558 : vector<1x4x32xf32> to vector<4x32xf32>
      %560 = vector.shape_cast %527 : vector<4x32xf32> to vector<1x4x32xf32>
      tpu.vector_store %arg8[%c1_136, %c0_137, %c0_138], %560 {strides = array<i32>} : memref<2x4x32xf32, #tpu.memory_space<vmem>>, vector<1x4x32xf32>,
    } else {
    }
    return
  }
  func.func @transform_0(%arg0: i32, %arg1: i32) -> (i32, i32, i32) {
    %c0_i32 = arith.constant 0 : i32
    %c0_i32_0 = arith.constant 0 : i32
    return %arg1, %arg0, %c0_i32 : i32, i32, i32
  }
  func.func @transform_1(%arg0: i32, %arg1: i32) -> (i32, i32) {
    %c0_i32 = arith.constant 0 : i32
    %c0_i32_0 = arith.constant 0 : i32
    %c0_i32_1 = arith.constant 0 : i32
    return %c0_i32, %c0_i32_0 : i32, i32
  }
  func.func @transform_2(%arg0: i32, %arg1: i32) -> (i32, i32) {
    %c0_i32 = arith.constant 0 : i32
    %c0_i32_0 = arith.constant 0 : i32
    %c0_i32_1 = arith.constant 0 : i32
    return %c0_i32, %c0_i32_0 : i32, i32
  }
  func.func @transform_3(%arg0: i32, %arg1: i32) -> (i32, i32) {
    %c0_i32 = arith.constant 0 : i32
    %c0_i32_0 = arith.constant 0 : i32
    %c0_i32_1 = arith.constant 0 : i32
    return %c0_i32, %c0_i32_0 : i32, i32
  }
  func.func @transform_4(%arg0: i32, %arg1: i32) -> (i32, i32, i32) {
    %c0_i32 = arith.constant 0 : i32
    %c0_i32_0 = arith.constant 0 : i32
    return %arg1, %arg0, %c0_i32 : i32, i32, i32
  }
  func.func @transform_5(%arg0: i32, %arg1: i32) -> (i32, i32, i32) {
    %c0_i32 = arith.constant 0 : i32
    %c0_i32_0 = arith.constant 0 : i32
    %c0_i32_1 = arith.constant 0 : i32
    return %c0_i32, %arg0, %c0_i32_0 : i32, i32, i32
  }
  func.func @transform_6(%arg0: i32, %arg1: i32) -> (i32, i32, i32) {
    %c0_i32 = arith.constant 0 : i32
    %c0_i32_0 = arith.constant 0 : i32
    %c0_i32_1 = arith.constant 0 : i32
    return %c0_i32, %arg0, %c0_i32_0 : i32, i32, i32
  }
}

</mosaic_0001>

<llo_original>
// kernel: rnn_base_lstm_forward.2
$region0: #{rnn_base_lstm_forward.2}
  #allocation0 [shape = 'u32[]', space=smem, size = 0x4, offset = 0x4, fixed_abs, tag = 'smem constant byte address 0x4 - core index']
  #allocation1 [shape = 'u32[72,128]{1,0:T(1,128)}', space=vmem, size = 0x9000, scoped, tag = 'internal scratch']
  %s0 = inlined_call_operand.vmem [shape: f32[64,16], index: 0, kind: input, shape index: {}]
  %s1 = inlined_call_operand.vmem [shape: bf16[16,128], index: 1, kind: input, shape index: {}]
  %s2 = inlined_call_operand.vmem [shape: f32[1,128], index: 2, kind: input, shape index: {}]
  %s3 = inlined_call_operand.vmem [shape: f32[64,128], index: 3, kind: output, shape index: {}]
  %s4 = sld [smem:[#allocation0]]
  $region22: #{rnn_base_lstm_forward.2} parent=0
    _
  %s6 = ssub.s32 1, %s4
  %s7 = scalar_select 0, %s6, %s4
  // Predicated region
  $region2: #{rnn_base_lstm_forward.2} parent=0 // pred_check
    _
  $region3: #{rnn_base_lstm_forward.2} parent=0 // pred_check_branch
    %9 = sbr.rel (0) target = $region5
  $region4: #{rnn_base_lstm_forward.2} parent=0 // pred_region
    _
  $region5: #{rnn_base_lstm_forward.2} parent=0 // pred_fallthru
    _
  // Predicated region
  $region6: #{rnn_base_lstm_forward.2} parent=0 // pred_check
    _
  $region7: #{rnn_base_lstm_forward.2} parent=0 // pred_check_branch
    %11 = sbr.rel (0) target = $region9
  $region8: #{rnn_base_lstm_forward.2} parent=0 // pred_region
    _
  $region9: #{rnn_base_lstm_forward.2} parent=0 // pred_fallthru
    _
  // Predicated region
  $region10: #{rnn_base_lstm_forward.2} parent=0 // pred_check
    _
  $region11: #{rnn_base_lstm_forward.2} parent=0 // pred_check_branch
    %13 = sbr.rel (0) target = $region13
  $region12: #{rnn_base_lstm_forward.2} parent=0 // pred_region
    _
  $region13: #{rnn_base_lstm_forward.2} parent=0 // pred_fallthru
    _
  %v15 = vld [vmem:[%s0] sm:$0xff]
  %v16 = vld [vmem:[%s0 + $0x8] sm:$0xff]
  %v17 = vld [vmem:[%s0 + $0x10] sm:$0xff]
  %v18 = vld [vmem:[%s0 + $0x18] sm:$0xff]
  %v19 = vld [vmem:[%s0 + $0x20] sm:$0xff]
  %v20 = vld [vmem:[%s0 + $0x28] sm:$0xff]
  %v21 = vld [vmem:[%s0 + $0x30] sm:$0xff]
  %v22 = vld [vmem:[%s0 + $0x38] sm:$0xff]
  %v23 = vpack.c.bf16 %v16, %v15
  %v24 = vpack.c.bf16 %v18, %v17
  %v25 = vpack.c.bf16 %v20, %v19
  %v26 = vpack.c.bf16 %v22, %v21
  %v27 = vld [vmem:[%s1] sm:$0xf]
  %v28 = vld [vmem:[%s1 + $0x4] sm:$0xf]
  %v29 = vld [vmem:[%s2] sm:$0x1]
  %v31 = vperm.slane %v29, 0
  %v35 = vunpack.c.l.b16 %v27
  %v36 = vunpack.c.l.b16 %v28
  %v37 = vpack.c.b16 %v36, %v35
  %vm39 = vcmask 130048
  %v41 = vsel %vm39, %v23, 0
  %v44 = vsel %vm39, %v24, 0
  %v47 = vsel %vm39, %v25, 0
  %v50 = vsel %vm39, %v26, 0
  %52 = vmatpush.bf16.msra.mxu0 0
  %53 = vmatpush.bf16.msra.mxu0 0
  %54 = vmatpush.bf16.msra.mxu0 0
  %55 = vmatpush.bf16.msra.mxu0 0
  %56 = vmatpush.bf16.msra.mxu0 0
  %57 = vmatpush.bf16.msra.mxu0 0
  %58 = vmatpush.bf16.msra.mxu0 0
  %59 = vmatpush.bf16.msra.mxu0 %v37
  %60 = vmatmul.bf16.gmra.mxu0 %v41
  %v61 = vpop.f32.mrf.mxu0
  %v62 = vadd.f32 %v31, %v61
  %v63 = vpop.f32.mrf.mxu0
  %v64 = vadd.f32 %v31, %v63
  %65 = vmatmul.bf16.gmra.mxu0 %v44
  %v66 = vpop.f32.mrf.mxu0
  %v67 = vadd.f32 %v31, %v66
  %v68 = vpop.f32.mrf.mxu0
  %v69 = vadd.f32 %v31, %v68
  %70 = vmatmul.bf16.gmra.mxu0 %v47
  %v71 = vpop.f32.mrf.mxu0
  %v72 = vadd.f32 %v31, %v71
  %v73 = vpop.f32.mrf.mxu0
  %v74 = vadd.f32 %v31, %v73
  %75 = vmatmul.bf16.gmra.mxu0 %v50
  %v76 = vpop.f32.mrf.mxu0
  %v77 = vadd.f32 %v31, %v76
  %v78 = vpop.f32.mrf.mxu0
  %v79 = vadd.f32 %v31, %v78
  %80 = vdwg.mxu0
  %81 = vst [vmem:[%s3] sm:$0xff] %v62
  %82 = vst [vmem:[%s3 + $0x8] sm:$0xff] %v64
  %83 = vst [vmem:[%s3 + $0x10] sm:$0xff] %v67
  %84 = vst [vmem:[%s3 + $0x18] sm:$0xff] %v69
  %85 = vst [vmem:[%s3 + $0x20] sm:$0xff] %v72
  %86 = vst [vmem:[%s3 + $0x28] sm:$0xff] %v74
  %87 = vst [vmem:[%s3 + $0x30] sm:$0xff] %v77
  %88 = vst [vmem:[%s3 + $0x38] sm:$0xff] %v79
  // Predicated region
  $region14: #{rnn_base_lstm_forward.2} parent=0 // pred_check
    _
  $region15: #{rnn_base_lstm_forward.2} parent=0 // pred_check_branch
    %90 = sbr.rel (0) target = $region17
  $region16: #{rnn_base_lstm_forward.2} parent=0 // pred_region
    _
  $region17: #{rnn_base_lstm_forward.2} parent=0 // pred_fallthru
    _
  // Predicated region
  $region18: #{rnn_base_lstm_forward.2} parent=0 // pred_check
    _
  $region19: #{rnn_base_lstm_forward.2} parent=0 // pred_check_branch
    %92 = sbr.rel (0) target = $region21
  $region20: #{rnn_base_lstm_forward.2} parent=0 // pred_region
    _
  $region21: #{rnn_base_lstm_forward.2} parent=0 // pred_fallthru
    _

// kernel: rnn_base_lstm_forward.3
$region0: #{rnn_base_lstm_forward.3}
  #allocation0 [shape = 'u32[]', space=smem, size = 0x4, offset = 0x4, fixed_abs, tag = 'smem constant byte address 0x4 - core index']
  #allocation1 [shape = 'u32[72,128]{1,0:T(1,128)}', space=vmem, size = 0x9000, scoped, tag = 'internal scratch']
  #allocation2 [shape = 'f32[2,4,32]{2,1,0:T(4,128)}', space=vmem, size = 0x1000, scoped, tag = 'scratch operand']
  #allocation3 [shape = 'f32[2,4,32]{2,1,0:T(4,128)}', space=vmem, size = 0x1000, scoped, tag = 'scratch operand']
  %s0 = inlined_call_operand.vmem [shape: f32[16,4,128], index: 0, kind: input, shape index: {}]
  %s1 = inlined_call_operand.vmem [shape: bf16[32,128], index: 1, kind: input, shape index: {}]
  %s2 = inlined_call_operand.vmem [shape: bf16[64,128], index: 2, kind: input, shape index: {}]
  %s3 = inlined_call_operand.vmem [shape: f32[1,128], index: 3, kind: input, shape index: {}]
  %s4 = inlined_call_operand.hbm [shape: f32[16,4,32], index: 4, kind: output, shape index: {0}]
  %s5 = inlined_call_operand.hbm [shape: f32[2,4,32], index: 5, kind: output, shape index: {1}]
  %s6 = inlined_call_operand.hbm [shape: f32[2,4,32], index: 6, kind: output, shape index: {2}]
  %7 = xla_tuple %s4, %s5, %s6
  %s8 = sld [smem:[#allocation0]]
  $region73: #{rnn_base_lstm_forward.3} parent=0
    _
  %s10 = ssub.s32 1, %s8
  %s11 = scalar_select 0, %s10, %s8
  $region1: #{rnn_base_lstm_forward.3} parent=0
    #allocation4 [shape = 'u8[32768]{0}', space=vmem, size = 0x8000, scoped, tag = 'output window, operand 0']
    #allocation5 [shape = 's32[2]{0}', space=sflag, size = 0x8, scoped, tag = 'scoped memory for rnn_base_lstm_forward.3']
    #allocation6 [shape = 'u8[4096]{0}', space=vmem, size = 0x1000, scoped, tag = 'output window, operand 1, single buffered']
    #allocation7 [shape = 's32[1]{0}', space=sflag, size = 0x4, scoped, tag = 'scoped memory for rnn_base_lstm_forward.3']
    #allocation8 [shape = 'u8[4096]{0}', space=vmem, size = 0x1000, scoped, tag = 'output window, operand 2, single buffered']
    %12 = vsyncpa [#allocation5], 0
    %s13 = scalar_lea.sflag [#allocation5], 1
    %14 = vsyncpa %s13, 0
    %15 = vsyncpa [#allocation7], 0
    loop: start=0, step=1, limit=4
    $region2: #{rnn_base_lstm_forward.3} parent=1 // loop_pre_header
      _
    $region3: #{rnn_base_lstm_forward.3} parent=1 // loop_header
      %s17 = sphi 0, %s21
      %p18 = scmp.ge.s32.totalorder %s17, 4
      %s24 = sphi 0, %s36
      %s25 = sphi 0, %s32
      %s26 = sphi 0, %s24
      %s27 = sphi 0, %s25
      %s28 = sphi 0, %s26
      %s29 = sphi 0, %s27
      %s41 = sphi 0, %s43
      %s44 = sphi 0, %s41
      %s45 = sphi 0, %s44
      %s61 = sphi 0, %s45
      %s65 = sphi 0, %s65
      %s67 = sphi 0, %s65
      %s68 = sphi 0, %s67
      %s82 = sphi 0, %s68
      %s86 = sphi 0, %s86
      %s88 = sphi 0, %s86
      %s89 = sphi 0, %s88
      %s103 = sphi 0, %s89
      %s107 = sphi 0, %s107
      %s109 = sphi 0, %s107
      %s110 = sphi 0, %s109
      %s124 = sphi 0, %s110
      %s132 = sphi 0, %s134
      %s135 = sphi 0, %s132
      %s136 = sphi 0, %s135
      %s152 = sphi 0, %s136
      %s158 = sphi 0, %s160
      %s161 = sphi 0, %s158
      %s162 = sphi 0, %s161
      %s178 = sphi 0, %s162
      %s184 = sphi 0, %s186
      %s187 = sphi 0, %s184
      %s188 = sphi 0, %s187
      %s204 = sphi 0, %s188
    $region4: #{rnn_base_lstm_forward.3} parent=1 // loop_header_branch
      %20 = sbr.rel (%p18) target = $region8
    $region5: #{rnn_base_lstm_forward.3} parent=1 // loop_body
      %s22 = ssub.s32 %s17, 1
      %s23 = ssub.s32 %s17, 2
      %s30 = sadd.s32 1, %s25
      %p31 = scmp.ge.s32.totalorder %s30, 2
      %s32 = scalar_select %p31, 0, %s30
      %s33 = sadd.s32 1, %s24
      %s34 = scalar_select %p31, %s33, %s24
      %p35 = scmp.ge.s32.totalorder %s34, 1
      %s36 = scalar_select %p35, 0, %s34
      %s37 = ssub.s32 %s25, %s32
      %s38 = ssub.s32 %s24, %s36
      %s39 = sor.u32 %s37, %s38
      %p40 = scmp.eq.s32.totalorder %s39, 0
      %s42 = sadd.s32 %s41, 1
      %s43 = scalar_select %p40, %s41, %s42
      %p46 = pneg %p40
      %p47 = scmp.eq.s32.totalorder %s17, 1
      %p48 = por %p46, %p47
      %p49 = scmp.ne.s32.totalorder %s41, %s44
      %p50 = scmp.eq.s32.totalorder %s17, 0
      %p51 = por %p49, %p50
      %p52 = scmp.ne.s32.totalorder %s41, %s44
      %p53 = scmp.eq.s32.totalorder %s22, 1
      %p54 = por %p52, %p53
      %p55 = scmp.ne.s32.totalorder %s44, %s45
      %p56 = scmp.eq.s32.totalorder %s22, 0
      %p57 = por %p55, %p56
      %p58 = scmp.ne.s32.totalorder %s44, %s45
      %p59 = scmp.eq.s32.totalorder %s23, 1
      %p60 = por %p58, %p59
      %p62 = scmp.ne.s32.totalorder %s45, %s61
      %p63 = scmp.eq.s32.totalorder %s23, 0
      %p64 = por %p62, %p63
      %s66 = sadd.s32 %s65, 1
      %p69 = scmp.eq.s32.totalorder %s17, 1
      %p70 = scmp.ne.s32.totalorder %s65, %s67
      %p71 = scmp.eq.s32.totalorder %s17, 0
      %p72 = por %p70, %p71
      %p73 = scmp.ne.s32.totalorder %s65, %s67
      %p74 = scmp.eq.s32.totalorder %s22, 1
      %p75 = por %p73, %p74
      %p76 = scmp.ne.s32.totalorder %s67, %s68
      %p77 = scmp.eq.s32.totalorder %s22, 0
      %p78 = por %p76, %p77
      %p79 = scmp.ne.s32.totalorder %s67, %s68
      %p80 = scmp.eq.s32.totalorder %s23, 1
      %p81 = por %p79, %p80
      %p83 = scmp.ne.s32.totalorder %s68, %s82
      %p84 = scmp.eq.s32.totalorder %s23, 0
      %p85 = por %p83, %p84
      %s87 = sadd.s32 %s86, 1
      %p90 = scmp.eq.s32.totalorder %s17, 1
      %p91 = scmp.ne.s32.totalorder %s86, %s88
      %p92 = scmp.eq.s32.totalorder %s17, 0
      %p93 = por %p91, %p92
      %p94 = scmp.ne.s32.totalorder %s86, %s88
      %p95 = scmp.eq.s32.totalorder %s22, 1
      %p96 = por %p94, %p95
      %p97 = scmp.ne.s32.totalorder %s88, %s89
      %p98 = scmp.eq.s32.totalorder %s22, 0
      %p99 = por %p97, %p98
      %p100 = scmp.ne.s32.totalorder %s88, %s89
      %p101 = scmp.eq.s32.totalorder %s23, 1
      %p102 = por %p100, %p101
      %p104 = scmp.ne.s32.totalorder %s89, %s103
      %p105 = scmp.eq.s32.totalorder %s23, 0
      %p106 = por %p104, %p105
      %s108 = sadd.s32 %s107, 1
      %p111 = scmp.eq.s32.totalorder %s17, 1
      %p112 = scmp.ne.s32.totalorder %s107, %s109
      %p113 = scmp.eq.s32.totalorder %s17, 0
      %p114 = por %p112, %p113
      %p115 = scmp.ne.s32.totalorder %s107, %s109
      %p116 = scmp.eq.s32.totalorder %s22, 1
      %p117 = por %p115, %p116
      %p118 = scmp.ne.s32.totalorder %s109, %s110
      %p119 = scmp.eq.s32.totalorder %s22, 0
      %p120 = por %p118, %p119
      %p121 = scmp.ne.s32.totalorder %s109, %s110
      %p122 = scmp.eq.s32.totalorder %s23, 1
      %p123 = por %p121, %p122
      %p125 = scmp.ne.s32.totalorder %s110, %s124
      %p126 = scmp.eq.s32.totalorder %s23, 0
      %p127 = por %p125, %p126
      %s128 = ssub.s32 %s25, %s32
      %s129 = ssub.s32 %s24, %s36
      %s130 = sor.u32 %s128, %s129
      %p131 = scmp.eq.s32.totalorder %s130, 0
      %s133 = sadd.s32 %s132, 1
      %s134 = scalar_select %p131, %s132, %s133
      %p137 = pneg %p131
      %p138 = scmp.eq.s32.totalorder %s17, 1
      %p139 = por %p137, %p138
      %p140 = scmp.ne.s32.totalorder %s132, %s135
      %p141 = scmp.eq.s32.totalorder %s17, 0
      %p142 = por %p140, %p141
      %p143 = scmp.ne.s32.totalorder %s132, %s135
      %p144 = scmp.eq.s32.totalorder %s22, 1
      %p145 = por %p143, %p144
      %p146 = scmp.ne.s32.totalorder %s135, %s136
      %p147 = scmp.eq.s32.totalorder %s22, 0
      %p148 = por %p146, %p147
      %p149 = scmp.ne.s32.totalorder %s135, %s136
      %p150 = scmp.eq.s32.totalorder %s23, 1
      %p151 = por %p149, %p150
      %p153 = scmp.ne.s32.totalorder %s136, %s152
      %p154 = scmp.eq.s32.totalorder %s23, 0
      %p155 = por %p153, %p154
      %s156 = ssub.s32 %s24, %s36
      %p157 = scmp.eq.s32.totalorder %s156, 0
      %s159 = sadd.s32 %s158, 1
      %s160 = scalar_select %p157, %s158, %s159
      %p163 = pneg %p157
      %p164 = scmp.eq.s32.totalorder %s17, 1
      %p165 = por %p163, %p164
      %p166 = scmp.ne.s32.totalorder %s158, %s161
      %p167 = scmp.eq.s32.totalorder %s17, 0
      %p168 = por %p166, %p167
      %p169 = scmp.ne.s32.totalorder %s158, %s161
      %p170 = scmp.eq.s32.totalorder %s22, 1
      %p171 = por %p169, %p170
      %p172 = scmp.ne.s32.totalorder %s161, %s162
      %p173 = scmp.eq.s32.totalorder %s22, 0
      %p174 = por %p172, %p173
      %p175 = scmp.ne.s32.totalorder %s161, %s162
      %p176 = scmp.eq.s32.totalorder %s23, 1
      %p177 = por %p175, %p176
      %p179 = scmp.ne.s32.totalorder %s162, %s178
      %p180 = scmp.eq.s32.totalorder %s23, 0
      %p181 = por %p179, %p180
      %s182 = ssub.s32 %s24, %s36
      %p183 = scmp.eq.s32.totalorder %s182, 0
      %s185 = sadd.s32 %s184, 1
      %s186 = scalar_select %p183, %s184, %s185
      %p189 = pneg %p183
      %p190 = scmp.eq.s32.totalorder %s17, 1
      %p191 = por %p189, %p190
      %p192 = scmp.ne.s32.totalorder %s184, %s187
      %p193 = scmp.eq.s32.totalorder %s17, 0
      %p194 = por %p192, %p193
      %p195 = scmp.ne.s32.totalorder %s184, %s187
      %p196 = scmp.eq.s32.totalorder %s22, 1
      %p197 = por %p195, %p196
      %p198 = scmp.ne.s32.totalorder %s187, %s188
      %p199 = scmp.eq.s32.totalorder %s22, 0
      %p200 = por %p198, %p199
      %p201 = scmp.ne.s32.totalorder %s187, %s188
      %p202 = scmp.eq.s32.totalorder %s23, 1
      %p203 = por %p201, %p202
      %p205 = scmp.ne.s32.totalorder %s188, %s204
      %p206 = scmp.eq.s32.totalorder %s23, 0
      %p207 = por %p205, %p206
      %p208 = scmp.le.s32.totalorder 1, %s17
      %p209 = scmp.lt.s32.totalorder %s17, 3
      %p210 = pnand %p208, %p209
      %p211 = pneg %p210
      // Predicated region
      $region9: #{rnn_base_lstm_forward.3} parent=5 // pred_check
        _
      $region10: #{rnn_base_lstm_forward.3} parent=5 // pred_check_branch
        %213 = sbr.rel (%p210) target = $region12
      $region11: #{rnn_base_lstm_forward.3} parent=5 // pred_region
        %s214 = ssub.s32 %s17, 1
        // Predicated region
        $region13: #{rnn_base_lstm_forward.3} parent=11 // pred_check
          %p215 = pneg %p78
        $region14: #{rnn_base_lstm_forward.3} parent=11 // pred_check_branch
          %217 = sbr.rel (%p215) target = $region16
        $region15: #{rnn_base_lstm_forward.3} parent=11 // pred_region
          _
        $region16: #{rnn_base_lstm_forward.3} parent=11 // pred_fallthru
          _
        // Predicated region
        $region17: #{rnn_base_lstm_forward.3} parent=11 // pred_check
          %p218 = pneg %p99
        $region18: #{rnn_base_lstm_forward.3} parent=11 // pred_check_branch
          %220 = sbr.rel (%p218) target = $region20
        $region19: #{rnn_base_lstm_forward.3} parent=11 // pred_region
          _
        $region20: #{rnn_base_lstm_forward.3} parent=11 // pred_fallthru
          _
        // Predicated region
        $region21: #{rnn_base_lstm_forward.3} parent=11 // pred_check
          %p221 = pneg %p120
        $region22: #{rnn_base_lstm_forward.3} parent=11 // pred_check_branch
          %223 = sbr.rel (%p221) target = $region24
        $region23: #{rnn_base_lstm_forward.3} parent=11 // pred_region
          _
        $region24: #{rnn_base_lstm_forward.3} parent=11 // pred_fallthru
          _
      $region12: #{rnn_base_lstm_forward.3} parent=5 // pred_fallthru
        _
      %p224 = scmp.lt.s32.totalorder %s17, 2
      // Predicated region
      $region25: #{rnn_base_lstm_forward.3} parent=5 // pred_check
        %p225 = pneg %p224
      $region26: #{rnn_base_lstm_forward.3} parent=5 // pred_check_branch
        %227 = sbr.rel (%p225) target = $region28
      $region27: #{rnn_base_lstm_forward.3} parent=5 // pred_region
        // Predicated region
        $region29: #{rnn_base_lstm_forward.3} parent=27 // pred_check
          %p228 = pneg %p51
        $region30: #{rnn_base_lstm_forward.3} parent=27 // pred_check_branch
          %230 = sbr.rel (%p228) target = $region32
        $region31: #{rnn_base_lstm_forward.3} parent=27 // pred_region
          %s231 = smul.u32 8, %s25
          %p232 = scmp.lt.s32.totalorder %s231, 15
          %s233 = scalar_select %p232, %s231, 15
          %p234 = scmp.lt.s32.totalorder %s24, 0
          %s235 = scalar_select %p234, %s24, 0
          %s236 = sadd.s32 %s235, %s233
          %s237 = smul.addr %s236, 4
          %s238 = scalar_lea.vmem %s0, %s237
          %s239 = smul.u32 8, %s25
        $region32: #{rnn_base_lstm_forward.3} parent=27 // pred_fallthru
          _
      $region28: #{rnn_base_lstm_forward.3} parent=5 // pred_fallthru
        _
      %p240 = scmp.le.s32.totalorder 1, %s17
      %p241 = scmp.lt.s32.totalorder %s17, 3
      %p242 = pnand %p240, %p241
      %p243 = pneg %p242
      // Predicated region
      $region33: #{rnn_base_lstm_forward.3} parent=5 // pred_check
        _
      $region34: #{rnn_base_lstm_forward.3} parent=5 // pred_check_branch
        %245 = sbr.rel (%p242) target = $region36
      $region35: #{rnn_base_lstm_forward.3} parent=5 // pred_region
        %s246 = ssub.s32 %s17, 1
        %s247 = smul.u32 8, %s27
        %p248 = scmp.lt.s32.totalorder %s247, 15
        %s249 = scalar_select %p248, %s247, 15
        %p250 = scmp.lt.s32.totalorder %s26, 0
        %s251 = scalar_select %p250, %s26, 0
        %s252 = sadd.s32 %s251, %s249
        %s253 = smul.addr %s252, 4
        %s254 = scalar_lea.vmem %s0, %s253
        %p255 = pneg %p57
        %p256 = pneg %p54
        %p257 = pneg %p78
        %p258 = pneg %p75
        %p259 = pneg %p99
        %p260 = pneg %p96
        %p261 = pneg %p120
        %p262 = pneg %p117
        %p263 = pneg %p148
        %p264 = pneg %p145
        %s265 = sand.u32 %s135, 1
        %s266 = scalar_lea.sflag [#allocation5], %s265
        %s267 = sand.u32 %s135, 1
        %s268 = smul.addr %s267, 32
        %s269 = scalar_lea.vmem [#allocation4], %s268
        %p270 = pneg %p174
        %p271 = pneg %p171
        %p272 = pneg %p200
        %p273 = pneg %p197
        %s274 = smul.u32 8, %s27
        %p275 = scmp.lt.s32.totalorder %s274, 15
        %s276 = scalar_select %p275, %s274, 15
        %p277 = scmp.lt.s32.totalorder %s26, 0
        %s278 = scalar_select %p277, %s26, 0
        %s279 = sadd.s32 %s278, %s276
        %s280 = smul.addr %s279, 4
        %s281 = scalar_lea.vmem %s0, %s280
        %s282 = smul.u32 8, %s27
        %s283 = smul.u32 8, %s27
        %p285 = scmp.eq.s32.totalorder %s27, 0
        // Predicated region
        $region37: #{rnn_base_lstm_forward.3} parent=35 // pred_check
          %p286 = pneg %p285
        $region38: #{rnn_base_lstm_forward.3} parent=35 // pred_check_branch
          %288 = sbr.rel (%p286) target = $region40
        $region39: #{rnn_base_lstm_forward.3} parent=35 // pred_region
          %vm289 = vcmask 257024
          %290 = vst.msk [vmem:[#allocation2] sm:$0xf] %vm289, 0.0
          %291 = vst.msk [vmem:[#allocation2 + $0x4] sm:$0xf] %vm289, 0.0
          %292 = vst.msk [vmem:[#allocation3] sm:$0xf] %vm289, 0.0
          %293 = vst.msk [vmem:[#allocation3 + $0x4] sm:$0xf] %vm289, 0.0
        $region40: #{rnn_base_lstm_forward.3} parent=35 // pred_fallthru
          _
        %v294 = vld [vmem:[%s1] sm:$0xf]
        %v295 = vld [vmem:[%s1 + $0x4] sm:$0xf]
        %v296 = vld [vmem:[%s1 + $0x8] sm:$0xf]
        %v297 = vld [vmem:[%s1 + $0xc] sm:$0xf]
        %v298 = vld [vmem:[%s2] sm:$0xf]
        %v299 = vld [vmem:[%s2 + $0x4] sm:$0xf]
        %v300 = vld [vmem:[%s2 + $0x8] sm:$0xf]
        %v301 = vld [vmem:[%s2 + $0xc] sm:$0xf]
        %v302 = vld [vmem:[%s2 + $0x10] sm:$0xf]
        %v303 = vld [vmem:[%s2 + $0x14] sm:$0xf]
        %v304 = vld [vmem:[%s2 + $0x18] sm:$0xf]
        %v305 = vld [vmem:[%s2 + $0x1c] sm:$0xf]
        %v306 = vld [vmem:[%s3] sm:$0x1]
        %v307 = vld [vmem:[#allocation2] sm:$0xf]
        %v308 = vld [vmem:[#allocation3] sm:$0xf]
        %s309 = scalar_lea.vmem [#allocation2], 4
        %v310 = vld [vmem:[%s309] sm:$0xf]
        %s311 = scalar_lea.vmem [#allocation3], 4
        %v312 = vld [vmem:[%s311] sm:$0xf]
        %v313 = vld [vmem:[%s281] sm:$0xf]
        %v314 = vpack.c.bf16 %v307, %v307
        %v319 = vunpack.c.l.b16 %v294
        %v320 = vunpack.c.l.b16 %v295
        %v321 = vunpack.c.l.b16 %v296
        %v322 = vunpack.c.l.b16 %v297
        %v323 = vpack.c.b16 %v320, %v319
        %v324 = vpack.c.b16 %v322, %v321
        %vm327 = vcmask 261120
        %v329 = vsel %vm327, %v314, 0
        %331 = vmatpush.bf16.msra.mxu0 0
        %332 = vmatpush.bf16.msra.mxu0 0
        %333 = vmatpush.bf16.msra.mxu0 0
        %334 = vmatpush.bf16.msra.mxu0 0
        %335 = vmatpush.bf16.msra.mxu0 0
        %336 = vmatpush.bf16.msra.mxu0 0
        %337 = vmatpush.bf16.msra.mxu0 %v324
        %338 = vmatpush.bf16.msra.mxu0 %v323
        %339 = vmatmul.bf16.gmra.mxu0 %v329
        %v340 = vpop.f32.mrf.mxu0
        %v341 = vadd.f32 0.0, %v340
        %v342 = vpop.f32.mrf.mxu0
        %343 = vdwg.mxu0
        %v344 = vadd.f32 %v313, %v341
        %v345 = vxor.u32 %v344, 2147483648
        %v346 = vmul.f32 %v345, 1.442695
        %v347 = vpow.pop %v346
        %v348 = vadd.f32 %v347, 1.0
        %v349 = vrcp.pop %v348
        %v350 = vmul.f32 %v348, %v349
        %v351 = vsub.f32 1.0, %v350
        %v352 = vmul.f32 %v349, %v351
        %v353 = vadd.f32 %v349, %v352
        %vm354 = vweird.f32 %v348
        %vm355 = vweird.f32 %v349
        %vm356 = vmor %vm354, %vm355
        %v357 = vsel %vm356, %v349, %v353
        %v358 = vand.u32 2147483647, %v348
        %vm359 = vcmp.eq.f32.partialorder %v358, 8.507059e+37
        %v360 = vand.u32 %v348, 2147483648
        %v361 = vor.u32 1.1754944e-38, %v360
        %v362 = vsel %vm359, %v361, %v357
        %v363 = vmul.f32 1.0, %v362
        %v364 = vtanh.pop %v344
        %366 = vrot.lane.b32.xlu0 %v308, 32
        %v367 = vpop.permute.xlu0 %366
        %v369 = vmul.f32 %v363, %v367
        %371 = vrot.lane.b32.xlu0 %v364, 64
        %v372 = vpop.permute.xlu0 %371
        %v374 = vmul.f32 %v363, %v372
        %376 = vrot.lane.b32.xlu0 %v374, 32
        %v377 = vpop.permute.xlu0 %376
        %v379 = vadd.f32 %v369, %v377
        %v380 = vtanh.pop %v379
        %382 = vrot.lane.b32.xlu0 %v380, 64
        %v383 = vpop.permute.xlu0 %382
        %v385 = vmul.f32 %v363, %v383
        %387 = vrot.lane.b32.xlu0 %v385, 32
        %v388 = vpop.permute.xlu0 %387
        %391 = vrot.lane.b32.xlu0 %v310, 32
        %v392 = vpop.permute.xlu0 %391
        %v394 = vsel %vm327, %v388, %v392
        %v395 = vpack.c.bf16 %v394, %v394
        %v397 = vperm.slane %v306, 0
        %v407 = vunpack.c.l.b16 %v298
        %v408 = vunpack.c.l.b16 %v299
        %v409 = vunpack.c.l.b16 %v300
        %v410 = vunpack.c.l.b16 %v301
        %v411 = vunpack.c.l.b16 %v302
        %v412 = vunpack.c.l.b16 %v303
        %v413 = vunpack.c.l.b16 %v304
        %v414 = vunpack.c.l.b16 %v305
        %v415 = vpack.c.b16 %v408, %v407
        %v416 = vpack.c.b16 %v410, %v409
        %v417 = vpack.c.b16 %v412, %v411
        %v418 = vpack.c.b16 %v414, %v413
        %vm423 = vcmask 523264
        %v425 = vsel %vm423, %v395, 0
        %427 = vmatpush.bf16.msra.mxu0 0
        %428 = vmatpush.bf16.msra.mxu0 0
        %429 = vmatpush.bf16.msra.mxu0 0
        %430 = vmatpush.bf16.msra.mxu0 0
        %431 = vmatpush.bf16.msra.mxu0 %v418
        %432 = vmatpush.bf16.msra.mxu0 %v417
        %433 = vmatpush.bf16.msra.mxu0 %v416
        %434 = vmatpush.bf16.msra.mxu0 %v415
        %435 = vmatmul.bf16.gmra.mxu0 %v425
        %v436 = vpop.f32.mrf.mxu0
        %v437 = vadd.f32 %v397, %v436
        %v438 = vpop.f32.mrf.mxu0
        %439 = vdwg.mxu0
        %v440 = vxor.u32 %v437, 2147483648
        %v441 = vmul.f32 %v440, 1.442695
        %v442 = vpow.pop %v441
        %v443 = vadd.f32 %v442, 1.0
        %v444 = vrcp.pop %v443
        %v445 = vmul.f32 %v443, %v444
        %v446 = vsub.f32 1.0, %v445
        %v447 = vmul.f32 %v444, %v446
        %v448 = vadd.f32 %v444, %v447
        %vm449 = vweird.f32 %v443
        %vm450 = vweird.f32 %v444
        %vm451 = vmor %vm449, %vm450
        %v452 = vsel %vm451, %v444, %v448
        %v453 = vand.u32 2147483647, %v443
        %vm454 = vcmp.eq.f32.partialorder %v453, 8.507059e+37
        %v455 = vand.u32 %v443, 2147483648
        %v456 = vor.u32 1.1754944e-38, %v455
        %v457 = vsel %vm454, %v456, %v452
        %v458 = vmul.f32 1.0, %v457
        %v459 = vtanh.pop %v437
        %461 = vrot.lane.b32.xlu0 %v312, 32
        %v462 = vpop.permute.xlu0 %461
        %v464 = vmul.f32 %v458, %v462
        %466 = vrot.lane.b32.xlu0 %v459, 64
        %v467 = vpop.permute.xlu0 %466
        %v469 = vmul.f32 %v458, %v467
        %471 = vrot.lane.b32.xlu0 %v469, 32
        %v472 = vpop.permute.xlu0 %471
        %v474 = vadd.f32 %v464, %v472
        %v475 = vtanh.pop %v474
        %477 = vrot.lane.b32.xlu0 %v475, 64
        %v478 = vpop.permute.xlu0 %477
        %v480 = vmul.f32 %v458, %v478
        %482 = vrot.lane.b32.xlu0 %v480, 32
        %v483 = vpop.permute.xlu0 %482
        %vm485 = vcmask 257024
        %486 = vst.msk [vmem:[%s269] sm:$0xf] %vm485, %v483
        %s487 = scalar_lea.vmem %s281, 4
        %v488 = vld [vmem:[%s487] sm:$0xf]
        %v489 = vpack.c.bf16 %v385, %v385
        %491 = vrot.lane.b32.xlu0 %v489, 32
        %v492 = vpop.permute.xlu0 %491
        %v494 = vsel %vm327, %v492, 0
        %496 = vmatpush.bf16.msra.mxu0 0
        %497 = vmatpush.bf16.msra.mxu0 0
        %498 = vmatpush.bf16.msra.mxu0 0
        %499 = vmatpush.bf16.msra.mxu0 0
        %500 = vmatpush.bf16.msra.mxu0 0
        %501 = vmatpush.bf16.msra.mxu0 0
        %502 = vmatpush.bf16.msra.mxu0 %v324
        %503 = vmatpush.bf16.msra.mxu0 %v323
        %504 = vmatmul.bf16.gmra.mxu0 %v494
        %v505 = vpop.f32.mrf.mxu0
        %v506 = vadd.f32 0.0, %v505
        %v507 = vpop.f32.mrf.mxu0
        %508 = vdwg.mxu0
        %v509 = vadd.f32 %v488, %v506
        %v510 = vxor.u32 %v509, 2147483648
        %v511 = vmul.f32 %v510, 1.442695
        %v512 = vpow.pop %v511
        %v513 = vadd.f32 %v512, 1.0
        %v514 = vrcp.pop %v513
        %v515 = vmul.f32 %v513, %v514
        %v516 = vsub.f32 1.0, %v515
        %v517 = vmul.f32 %v514, %v516
        %v518 = vadd.f32 %v514, %v517
        %vm519 = vweird.f32 %v513
        %vm520 = vweird.f32 %v514
        %vm521 = vmor %vm519, %vm520
        %v522 = vsel %vm521, %v514, %v518
        %v523 = vand.u32 2147483647, %v513
        %vm524 = vcmp.eq.f32.partialorder %v523, 8.507059e+37
        %v525 = vand.u32 %v513, 2147483648
        %v526 = vor.u32 1.1754944e-38, %v525
        %v527 = vsel %vm524, %v526, %v522
        %v528 = vmul.f32 1.0, %v527
        %v529 = vtanh.pop %v509
        %v530 = vmul.f32 %v528, %v379
        %532 = vrot.lane.b32.xlu0 %v529, 64
        %v533 = vpop.permute.xlu0 %532
        %v535 = vmul.f32 %v528, %v533
        %537 = vrot.lane.b32.xlu0 %v535, 32
        %v538 = vpop.permute.xlu0 %537
        %v540 = vadd.f32 %v530, %v538
        %v541 = vtanh.pop %v540
        %543 = vrot.lane.b32.xlu0 %v541, 64
        %v544 = vpop.permute.xlu0 %543
        %v546 = vmul.f32 %v528, %v544
        %548 = vrot.lane.b32.xlu0 %v546, 32
        %v549 = vpop.permute.xlu0 %548
        %551 = vrot.lane.b32.xlu0 %v480, 64
        %v552 = vpop.permute.xlu0 %551
        %v554 = vsel %vm327, %v549, %v552
        %v555 = vpack.c.bf16 %v554, %v554
        %v557 = vsel %vm423, %v555, 0
        %559 = vmatpush.bf16.msra.mxu0 0
        %560 = vmatpush.bf16.msra.mxu0 0
        %561 = vmatpush.bf16.msra.mxu0 0
        %562 = vmatpush.bf16.msra.mxu0 0
        %563 = vmatpush.bf16.msra.mxu0 %v418
        %564 = vmatpush.bf16.msra.mxu0 %v417
        %565 = vmatpush.bf16.msra.mxu0 %v416
        %566 = vmatpush.bf16.msra.mxu0 %v415
        %567 = vmatmul.bf16.gmra.mxu0 %v557
        %v568 = vpop.f32.mrf.mxu0
        %v569 = vadd.f32 %v397, %v568
        %v570 = vpop.f32.mrf.mxu0
        %571 = vdwg.mxu0
        %v572 = vxor.u32 %v569, 2147483648
        %v573 = vmul.f32 %v572, 1.442695
        %v574 = vpow.pop %v573
        %v575 = vadd.f32 %v574, 1.0
        %v576 = vrcp.pop %v575
        %v577 = vmul.f32 %v575, %v576
        %v578 = vsub.f32 1.0, %v577
        %v579 = vmul.f32 %v576, %v578
        %v580 = vadd.f32 %v576, %v579
        %vm581 = vweird.f32 %v575
        %vm582 = vweird.f32 %v576
        %vm583 = vmor %vm581, %vm582
        %v584 = vsel %vm583, %v576, %v580
        %v585 = vand.u32 2147483647, %v575
        %vm586 = vcmp.eq.f32.partialorder %v585, 8.507059e+37
        %v587 = vand.u32 %v575, 2147483648
        %v588 = vor.u32 1.1754944e-38, %v587
        %v589 = vsel %vm586, %v588, %v584
        %v590 = vmul.f32 1.0, %v589
        %v591 = vtanh.pop %v569
        %v592 = vmul.f32 %v590, %v474
        %594 = vrot.lane.b32.xlu0 %v591, 64
        %v595 = vpop.permute.xlu0 %594
        %v597 = vmul.f32 %v590, %v595
        %599 = vrot.lane.b32.xlu0 %v597, 32
        %v600 = vpop.permute.xlu0 %599
        %v602 = vadd.f32 %v592, %v600
        %v603 = vtanh.pop %v602
        %605 = vrot.lane.b32.xlu0 %v603, 64
        %v606 = vpop.permute.xlu0 %605
        %v608 = vmul.f32 %v590, %v606
        %610 = vrot.lane.b32.xlu0 %v608, 32
        %v611 = vpop.permute.xlu0 %610
        %s613 = scalar_lea.vmem %s269, 4 [#allocation4]
        %614 = vst.msk [vmem:[%s613] sm:$0xf] %vm485, %v611
        %s615 = scalar_lea.vmem %s281, 8
        %v616 = vld [vmem:[%s615] sm:$0xf]
        %v617 = vpack.c.bf16 %v546, %v546
        %619 = vrot.lane.b32.xlu0 %v617, 32
        %v620 = vpop.permute.xlu0 %619
        %v622 = vsel %vm327, %v620, 0
        %624 = vmatpush.bf16.msra.mxu0 0
        %625 = vmatpush.bf16.msra.mxu0 0
        %626 = vmatpush.bf16.msra.mxu0 0
        %627 = vmatpush.bf16.msra.mxu0 0
        %628 = vmatpush.bf16.msra.mxu0 0
        %629 = vmatpush.bf16.msra.mxu0 0
        %630 = vmatpush.bf16.msra.mxu0 %v324
        %631 = vmatpush.bf16.msra.mxu0 %v323
        %632 = vmatmul.bf16.gmra.mxu0 %v622
        %v633 = vpop.f32.mrf.mxu0
        %v634 = vadd.f32 0.0, %v633
        %v635 = vpop.f32.mrf.mxu0
        %636 = vdwg.mxu0
        %v637 = vadd.f32 %v616, %v634
        %v638 = vxor.u32 %v637, 2147483648
        %v639 = vmul.f32 %v638, 1.442695
        %v640 = vpow.pop %v639
        %v641 = vadd.f32 %v640, 1.0
        %v642 = vrcp.pop %v641
        %v643 = vmul.f32 %v641, %v642
        %v644 = vsub.f32 1.0, %v643
        %v645 = vmul.f32 %v642, %v644
        %v646 = vadd.f32 %v642, %v645
        %vm647 = vweird.f32 %v641
        %vm648 = vweird.f32 %v642
        %vm649 = vmor %vm647, %vm648
        %v650 = vsel %vm649, %v642, %v646
        %v651 = vand.u32 2147483647, %v641
        %vm652 = vcmp.eq.f32.partialorder %v651, 8.507059e+37
        %v653 = vand.u32 %v641, 2147483648
        %v654 = vor.u32 1.1754944e-38, %v653
        %v655 = vsel %vm652, %v654, %v650
        %v656 = vmul.f32 1.0, %v655
        %v657 = vtanh.pop %v637
        %v658 = vmul.f32 %v656, %v540
        %660 = vrot.lane.b32.xlu0 %v657, 64
        %v661 = vpop.permute.xlu0 %660
        %v663 = vmul.f32 %v656, %v661
        %665 = vrot.lane.b32.xlu0 %v663, 32
        %v666 = vpop.permute.xlu0 %665
        %v668 = vadd.f32 %v658, %v666
        %v669 = vtanh.pop %v668
        %671 = vrot.lane.b32.xlu0 %v669, 64
        %v672 = vpop.permute.xlu0 %671
        %v674 = vmul.f32 %v656, %v672
        %676 = vrot.lane.b32.xlu0 %v674, 32
        %v677 = vpop.permute.xlu0 %676
        %679 = vrot.lane.b32.xlu0 %v608, 64
        %v680 = vpop.permute.xlu0 %679
        %v682 = vsel %vm327, %v677, %v680
        %v683 = vpack.c.bf16 %v682, %v682
        %v685 = vsel %vm423, %v683, 0
        %687 = vmatpush.bf16.msra.mxu0 0
        %688 = vmatpush.bf16.msra.mxu0 0
        %689 = vmatpush.bf16.msra.mxu0 0
        %690 = vmatpush.bf16.msra.mxu0 0
        %691 = vmatpush.bf16.msra.mxu0 %v418
        %692 = vmatpush.bf16.msra.mxu0 %v417
        %693 = vmatpush.bf16.msra.mxu0 %v416
        %694 = vmatpush.bf16.msra.mxu0 %v415
        %695 = vmatmul.bf16.gmra.mxu0 %v685
        %v696 = vpop.f32.mrf.mxu0
        %v697 = vadd.f32 %v397, %v696
        %v698 = vpop.f32.mrf.mxu0
        %699 = vdwg.mxu0
        %v700 = vxor.u32 %v697, 2147483648
        %v701 = vmul.f32 %v700, 1.442695
        %v702 = vpow.pop %v701
        %v703 = vadd.f32 %v702, 1.0
        %v704 = vrcp.pop %v703
        %v705 = vmul.f32 %v703, %v704
        %v706 = vsub.f32 1.0, %v705
        %v707 = vmul.f32 %v704, %v706
        %v708 = vadd.f32 %v704, %v707
        %vm709 = vweird.f32 %v703
        %vm710 = vweird.f32 %v704
        %vm711 = vmor %vm709, %vm710
        %v712 = vsel %vm711, %v704, %v708
        %v713 = vand.u32 2147483647, %v703
        %vm714 = vcmp.eq.f32.partialorder %v713, 8.507059e+37
        %v715 = vand.u32 %v703, 2147483648
        %v716 = vor.u32 1.1754944e-38, %v715
        %v717 = vsel %vm714, %v716, %v712
        %v718 = vmul.f32 1.0, %v717
        %v719 = vtanh.pop %v697
        %v720 = vmul.f32 %v718, %v602
        %722 = vrot.lane.b32.xlu0 %v719, 64
        %v723 = vpop.permute.xlu0 %722
        %v725 = vmul.f32 %v718, %v723
        %727 = vrot.lane.b32.xlu0 %v725, 32
        %v728 = vpop.permute.xlu0 %727
        %v730 = vadd.f32 %v720, %v728
        %v731 = vtanh.pop %v730
        %733 = vrot.lane.b32.xlu0 %v731, 64
        %v734 = vpop.permute.xlu0 %733
        %v736 = vmul.f32 %v718, %v734
        %738 = vrot.lane.b32.xlu0 %v736, 32
        %v739 = vpop.permute.xlu0 %738
        %s741 = scalar_lea.vmem %s269, 8 [#allocation4]
        %742 = vst.msk [vmem:[%s741] sm:$0xf] %vm485, %v739
        %s743 = scalar_lea.vmem %s281, 12
        %v744 = vld [vmem:[%s743] sm:$0xf]
        %v745 = vpack.c.bf16 %v674, %v674
        %747 = vrot.lane.b32.xlu0 %v745, 32
        %v748 = vpop.permute.xlu0 %747
        %v750 = vsel %vm327, %v748, 0
        %752 = vmatpush.bf16.msra.mxu0 0
        %753 = vmatpush.bf16.msra.mxu0 0
        %754 = vmatpush.bf16.msra.mxu0 0
        %755 = vmatpush.bf16.msra.mxu0 0
        %756 = vmatpush.bf16.msra.mxu0 0
        %757 = vmatpush.bf16.msra.mxu0 0
        %758 = vmatpush.bf16.msra.mxu0 %v324
        %759 = vmatpush.bf16.msra.mxu0 %v323
        %760 = vmatmul.bf16.gmra.mxu0 %v750
        %v761 = vpop.f32.mrf.mxu0
        %v762 = vadd.f32 0.0, %v761
        %v763 = vpop.f32.mrf.mxu0
        %764 = vdwg.mxu0
        %v765 = vadd.f32 %v744, %v762
        %v766 = vxor.u32 %v765, 2147483648
        %v767 = vmul.f32 %v766, 1.442695
        %v768 = vpow.pop %v767
        %v769 = vadd.f32 %v768, 1.0
        %v770 = vrcp.pop %v769
        %v771 = vmul.f32 %v769, %v770
        %v772 = vsub.f32 1.0, %v771
        %v773 = vmul.f32 %v770, %v772
        %v774 = vadd.f32 %v770, %v773
        %vm775 = vweird.f32 %v769
        %vm776 = vweird.f32 %v770
        %vm777 = vmor %vm775, %vm776
        %v778 = vsel %vm777, %v770, %v774
        %v779 = vand.u32 2147483647, %v769
        %vm780 = vcmp.eq.f32.partialorder %v779, 8.507059e+37
        %v781 = vand.u32 %v769, 2147483648
        %v782 = vor.u32 1.1754944e-38, %v781
        %v783 = vsel %vm780, %v782, %v778
        %v784 = vmul.f32 1.0, %v783
        %v785 = vtanh.pop %v765
        %v786 = vmul.f32 %v784, %v668
        %788 = vrot.lane.b32.xlu0 %v785, 64
        %v789 = vpop.permute.xlu0 %788
        %v791 = vmul.f32 %v784, %v789
        %793 = vrot.lane.b32.xlu0 %v791, 32
        %v794 = vpop.permute.xlu0 %793
        %v796 = vadd.f32 %v786, %v794
        %v797 = vtanh.pop %v796
        %799 = vrot.lane.b32.xlu0 %v797, 64
        %v800 = vpop.permute.xlu0 %799
        %v802 = vmul.f32 %v784, %v800
        %804 = vrot.lane.b32.xlu0 %v802, 32
        %v805 = vpop.permute.xlu0 %804
        %807 = vrot.lane.b32.xlu0 %v736, 64
        %v808 = vpop.permute.xlu0 %807
        %v810 = vsel %vm327, %v805, %v808
        %v811 = vpack.c.bf16 %v810, %v810
        %v813 = vsel %vm423, %v811, 0
        %815 = vmatpush.bf16.msra.mxu0 0
        %816 = vmatpush.bf16.msra.mxu0 0
        %817 = vmatpush.bf16.msra.mxu0 0
        %818 = vmatpush.bf16.msra.mxu0 0
        %819 = vmatpush.bf16.msra.mxu0 %v418
        %820 = vmatpush.bf16.msra.mxu0 %v417
        %821 = vmatpush.bf16.msra.mxu0 %v416
        %822 = vmatpush.bf16.msra.mxu0 %v415
        %823 = vmatmul.bf16.gmra.mxu0 %v813
        %v824 = vpop.f32.mrf.mxu0
        %v825 = vadd.f32 %v397, %v824
        %v826 = vpop.f32.mrf.mxu0
        %827 = vdwg.mxu0
        %v828 = vxor.u32 %v825, 2147483648
        %v829 = vmul.f32 %v828, 1.442695
        %v830 = vpow.pop %v829
        %v831 = vadd.f32 %v830, 1.0
        %v832 = vrcp.pop %v831
        %v833 = vmul.f32 %v831, %v832
        %v834 = vsub.f32 1.0, %v833
        %v835 = vmul.f32 %v832, %v834
        %v836 = vadd.f32 %v832, %v835
        %vm837 = vweird.f32 %v831
        %vm838 = vweird.f32 %v832
        %vm839 = vmor %vm837, %vm838
        %v840 = vsel %vm839, %v832, %v836
        %v841 = vand.u32 2147483647, %v831
        %vm842 = vcmp.eq.f32.partialorder %v841, 8.507059e+37
        %v843 = vand.u32 %v831, 2147483648
        %v844 = vor.u32 1.1754944e-38, %v843
        %v845 = vsel %vm842, %v844, %v840
        %v846 = vmul.f32 1.0, %v845
        %v847 = vtanh.pop %v825
        %v848 = vmul.f32 %v846, %v730
        %850 = vrot.lane.b32.xlu0 %v847, 64
        %v851 = vpop.permute.xlu0 %850
        %v853 = vmul.f32 %v846, %v851
        %855 = vrot.lane.b32.xlu0 %v853, 32
        %v856 = vpop.permute.xlu0 %855
        %v858 = vadd.f32 %v848, %v856
        %v859 = vtanh.pop %v858
        %861 = vrot.lane.b32.xlu0 %v859, 64
        %v862 = vpop.permute.xlu0 %861
        %v864 = vmul.f32 %v846, %v862
        %866 = vrot.lane.b32.xlu0 %v864, 32
        %v867 = vpop.permute.xlu0 %866
        %s869 = scalar_lea.vmem %s269, 12 [#allocation4]
        %870 = vst.msk [vmem:[%s869] sm:$0xf] %vm485, %v867
        %s871 = scalar_lea.vmem %s281, 16
        %v872 = vld [vmem:[%s871] sm:$0xf]
        %v873 = vpack.c.bf16 %v802, %v802
        %875 = vrot.lane.b32.xlu0 %v873, 32
        %v876 = vpop.permute.xlu0 %875
        %v878 = vsel %vm327, %v876, 0
        %880 = vmatpush.bf16.msra.mxu0 0
        %881 = vmatpush.bf16.msra.mxu0 0
        %882 = vmatpush.bf16.msra.mxu0 0
        %883 = vmatpush.bf16.msra.mxu0 0
        %884 = vmatpush.bf16.msra.mxu0 0
        %885 = vmatpush.bf16.msra.mxu0 0
        %886 = vmatpush.bf16.msra.mxu0 %v324
        %887 = vmatpush.bf16.msra.mxu0 %v323
        %888 = vmatmul.bf16.gmra.mxu0 %v878
        %v889 = vpop.f32.mrf.mxu0
        %v890 = vadd.f32 0.0, %v889
        %v891 = vpop.f32.mrf.mxu0
        %892 = vdwg.mxu0
        %v893 = vadd.f32 %v872, %v890
        %v894 = vxor.u32 %v893, 2147483648
        %v895 = vmul.f32 %v894, 1.442695
        %v896 = vpow.pop %v895
        %v897 = vadd.f32 %v896, 1.0
        %v898 = vrcp.pop %v897
        %v899 = vmul.f32 %v897, %v898
        %v900 = vsub.f32 1.0, %v899
        %v901 = vmul.f32 %v898, %v900
        %v902 = vadd.f32 %v898, %v901
        %vm903 = vweird.f32 %v897
        %vm904 = vweird.f32 %v898
        %vm905 = vmor %vm903, %vm904
        %v906 = vsel %vm905, %v898, %v902
        %v907 = vand.u32 2147483647, %v897
        %vm908 = vcmp.eq.f32.partialorder %v907, 8.507059e+37
        %v909 = vand.u32 %v897, 2147483648
        %v910 = vor.u32 1.1754944e-38, %v909
        %v911 = vsel %vm908, %v910, %v906
        %v912 = vmul.f32 1.0, %v911
        %v913 = vtanh.pop %v893
        %v914 = vmul.f32 %v912, %v796
        %916 = vrot.lane.b32.xlu0 %v913, 64
        %v917 = vpop.permute.xlu0 %916
        %v919 = vmul.f32 %v912, %v917
        %921 = vrot.lane.b32.xlu0 %v919, 32
        %v922 = vpop.permute.xlu0 %921
        %v924 = vadd.f32 %v914, %v922
        %v925 = vtanh.pop %v924
        %927 = vrot.lane.b32.xlu0 %v925, 64
        %v928 = vpop.permute.xlu0 %927
        %v930 = vmul.f32 %v912, %v928
        %932 = vrot.lane.b32.xlu0 %v930, 32
        %v933 = vpop.permute.xlu0 %932
        %935 = vrot.lane.b32.xlu0 %v864, 64
        %v936 = vpop.permute.xlu0 %935
        %v938 = vsel %vm327, %v933, %v936
        %v939 = vpack.c.bf16 %v938, %v938
        %v941 = vsel %vm423, %v939, 0
        %943 = vmatpush.bf16.msra.mxu0 0
        %944 = vmatpush.bf16.msra.mxu0 0
        %945 = vmatpush.bf16.msra.mxu0 0
        %946 = vmatpush.bf16.msra.mxu0 0
        %947 = vmatpush.bf16.msra.mxu0 %v418
        %948 = vmatpush.bf16.msra.mxu0 %v417
        %949 = vmatpush.bf16.msra.mxu0 %v416
        %950 = vmatpush.bf16.msra.mxu0 %v415
        %951 = vmatmul.bf16.gmra.mxu0 %v941
        %v952 = vpop.f32.mrf.mxu0
        %v953 = vadd.f32 %v397, %v952
        %v954 = vpop.f32.mrf.mxu0
        %955 = vdwg.mxu0
        %v956 = vxor.u32 %v953, 2147483648
        %v957 = vmul.f32 %v956, 1.442695
        %v958 = vpow.pop %v957
        %v959 = vadd.f32 %v958, 1.0
        %v960 = vrcp.pop %v959
        %v961 = vmul.f32 %v959, %v960
        %v962 = vsub.f32 1.0, %v961
        %v963 = vmul.f32 %v960, %v962
        %v964 = vadd.f32 %v960, %v963
        %vm965 = vweird.f32 %v959
        %vm966 = vweird.f32 %v960
        %vm967 = vmor %vm965, %vm966
        %v968 = vsel %vm967, %v960, %v964
        %v969 = vand.u32 2147483647, %v959
        %vm970 = vcmp.eq.f32.partialorder %v969, 8.507059e+37
        %v971 = vand.u32 %v959, 2147483648
        %v972 = vor.u32 1.1754944e-38, %v971
        %v973 = vsel %vm970, %v972, %v968
        %v974 = vmul.f32 1.0, %v973
        %v975 = vtanh.pop %v953
        %v976 = vmul.f32 %v974, %v858
        %978 = vrot.lane.b32.xlu0 %v975, 64
        %v979 = vpop.permute.xlu0 %978
        %v981 = vmul.f32 %v974, %v979
        %983 = vrot.lane.b32.xlu0 %v981, 32
        %v984 = vpop.permute.xlu0 %983
        %v986 = vadd.f32 %v976, %v984
        %v987 = vtanh.pop %v986
        %989 = vrot.lane.b32.xlu0 %v987, 64
        %v990 = vpop.permute.xlu0 %989
        %v992 = vmul.f32 %v974, %v990
        %994 = vrot.lane.b32.xlu0 %v992, 32
        %v995 = vpop.permute.xlu0 %994
        %s997 = scalar_lea.vmem %s269, 16 [#allocation4]
        %998 = vst.msk [vmem:[%s997] sm:$0xf] %vm485, %v995
        %s999 = scalar_lea.vmem %s281, 20
        %v1000 = vld [vmem:[%s999] sm:$0xf]
        %v1001 = vpack.c.bf16 %v930, %v930
        %1003 = vrot.lane.b32.xlu0 %v1001, 32
        %v1004 = vpop.permute.xlu0 %1003
        %v1006 = vsel %vm327, %v1004, 0
        %1008 = vmatpush.bf16.msra.mxu0 0
        %1009 = vmatpush.bf16.msra.mxu0 0
        %1010 = vmatpush.bf16.msra.mxu0 0
        %1011 = vmatpush.bf16.msra.mxu0 0
        %1012 = vmatpush.bf16.msra.mxu0 0
        %1013 = vmatpush.bf16.msra.mxu0 0
        %1014 = vmatpush.bf16.msra.mxu0 %v324
        %1015 = vmatpush.bf16.msra.mxu0 %v323
        %1016 = vmatmul.bf16.gmra.mxu0 %v1006
        %v1017 = vpop.f32.mrf.mxu0
        %v1018 = vadd.f32 0.0, %v1017
        %v1019 = vpop.f32.mrf.mxu0
        %1020 = vdwg.mxu0
        %v1021 = vadd.f32 %v1000, %v1018
        %v1022 = vxor.u32 %v1021, 2147483648
        %v1023 = vmul.f32 %v1022, 1.442695
        %v1024 = vpow.pop %v1023
        %v1025 = vadd.f32 %v1024, 1.0
        %v1026 = vrcp.pop %v1025
        %v1027 = vmul.f32 %v1025, %v1026
        %v1028 = vsub.f32 1.0, %v1027
        %v1029 = vmul.f32 %v1026, %v1028
        %v1030 = vadd.f32 %v1026, %v1029
        %vm1031 = vweird.f32 %v1025
        %vm1032 = vweird.f32 %v1026
        %vm1033 = vmor %vm1031, %vm1032
        %v1034 = vsel %vm1033, %v1026, %v1030
        %v1035 = vand.u32 2147483647, %v1025
        %vm1036 = vcmp.eq.f32.partialorder %v1035, 8.507059e+37
        %v1037 = vand.u32 %v1025, 2147483648
        %v1038 = vor.u32 1.1754944e-38, %v1037
        %v1039 = vsel %vm1036, %v1038, %v1034
        %v1040 = vmul.f32 1.0, %v1039
        %v1041 = vtanh.pop %v1021
        %v1042 = vmul.f32 %v1040, %v924
        %1044 = vrot.lane.b32.xlu0 %v1041, 64
        %v1045 = vpop.permute.xlu0 %1044
        %v1047 = vmul.f32 %v1040, %v1045
        %1049 = vrot.lane.b32.xlu0 %v1047, 32
        %v1050 = vpop.permute.xlu0 %1049
        %v1052 = vadd.f32 %v1042, %v1050
        %v1053 = vtanh.pop %v1052
        %1055 = vrot.lane.b32.xlu0 %v1053, 64
        %v1056 = vpop.permute.xlu0 %1055
        %v1058 = vmul.f32 %v1040, %v1056
        %1060 = vrot.lane.b32.xlu0 %v1058, 32
        %v1061 = vpop.permute.xlu0 %1060
        %1063 = vrot.lane.b32.xlu0 %v992, 64
        %v1064 = vpop.permute.xlu0 %1063
        %v1066 = vsel %vm327, %v1061, %v1064
        %v1067 = vpack.c.bf16 %v1066, %v1066
        %v1069 = vsel %vm423, %v1067, 0
        %1071 = vmatpush.bf16.msra.mxu0 0
        %1072 = vmatpush.bf16.msra.mxu0 0
        %1073 = vmatpush.bf16.msra.mxu0 0
        %1074 = vmatpush.bf16.msra.mxu0 0
        %1075 = vmatpush.bf16.msra.mxu0 %v418
        %1076 = vmatpush.bf16.msra.mxu0 %v417
        %1077 = vmatpush.bf16.msra.mxu0 %v416
        %1078 = vmatpush.bf16.msra.mxu0 %v415
        %1079 = vmatmul.bf16.gmra.mxu0 %v1069
        %v1080 = vpop.f32.mrf.mxu0
        %v1081 = vadd.f32 %v397, %v1080
        %v1082 = vpop.f32.mrf.mxu0
        %1083 = vdwg.mxu0
        %v1084 = vxor.u32 %v1081, 2147483648
        %v1085 = vmul.f32 %v1084, 1.442695
        %v1086 = vpow.pop %v1085
        %v1087 = vadd.f32 %v1086, 1.0
        %v1088 = vrcp.pop %v1087
        %v1089 = vmul.f32 %v1087, %v1088
        %v1090 = vsub.f32 1.0, %v1089
        %v1091 = vmul.f32 %v1088, %v1090
        %v1092 = vadd.f32 %v1088, %v1091
        %vm1093 = vweird.f32 %v1087
        %vm1094 = vweird.f32 %v1088
        %vm1095 = vmor %vm1093, %vm1094
        %v1096 = vsel %vm1095, %v1088, %v1092
        %v1097 = vand.u32 2147483647, %v1087
        %vm1098 = vcmp.eq.f32.partialorder %v1097, 8.507059e+37
        %v1099 = vand.u32 %v1087, 2147483648
        %v1100 = vor.u32 1.1754944e-38, %v1099
        %v1101 = vsel %vm1098, %v1100, %v1096
        %v1102 = vmul.f32 1.0, %v1101
        %v1103 = vtanh.pop %v1081
        %v1104 = vmul.f32 %v1102, %v986
        %1106 = vrot.lane.b32.xlu0 %v1103, 64
        %v1107 = vpop.permute.xlu0 %1106
        %v1109 = vmul.f32 %v1102, %v1107
        %1111 = vrot.lane.b32.xlu0 %v1109, 32
        %v1112 = vpop.permute.xlu0 %1111
        %v1114 = vadd.f32 %v1104, %v1112
        %v1115 = vtanh.pop %v1114
        %1117 = vrot.lane.b32.xlu0 %v1115, 64
        %v1118 = vpop.permute.xlu0 %1117
        %v1120 = vmul.f32 %v1102, %v1118
        %1122 = vrot.lane.b32.xlu0 %v1120, 32
        %v1123 = vpop.permute.xlu0 %1122
        %s1125 = scalar_lea.vmem %s269, 20 [#allocation4]
        %1126 = vst.msk [vmem:[%s1125] sm:$0xf] %vm485, %v1123
        %s1127 = scalar_lea.vmem %s281, 24
        %v1128 = vld [vmem:[%s1127] sm:$0xf]
        %v1129 = vpack.c.bf16 %v1058, %v1058
        %1131 = vrot.lane.b32.xlu0 %v1129, 32
        %v1132 = vpop.permute.xlu0 %1131
        %v1134 = vsel %vm327, %v1132, 0
        %1136 = vmatpush.bf16.msra.mxu0 0
        %1137 = vmatpush.bf16.msra.mxu0 0
        %1138 = vmatpush.bf16.msra.mxu0 0
        %1139 = vmatpush.bf16.msra.mxu0 0
        %1140 = vmatpush.bf16.msra.mxu0 0
        %1141 = vmatpush.bf16.msra.mxu0 0
        %1142 = vmatpush.bf16.msra.mxu0 %v324
        %1143 = vmatpush.bf16.msra.mxu0 %v323
        %1144 = vmatmul.bf16.gmra.mxu0 %v1134
        %v1145 = vpop.f32.mrf.mxu0
        %v1146 = vadd.f32 0.0, %v1145
        %v1147 = vpop.f32.mrf.mxu0
        %1148 = vdwg.mxu0
        %v1149 = vadd.f32 %v1128, %v1146
        %v1150 = vxor.u32 %v1149, 2147483648
        %v1151 = vmul.f32 %v1150, 1.442695
        %v1152 = vpow.pop %v1151
        %v1153 = vadd.f32 %v1152, 1.0
        %v1154 = vrcp.pop %v1153
        %v1155 = vmul.f32 %v1153, %v1154
        %v1156 = vsub.f32 1.0, %v1155
        %v1157 = vmul.f32 %v1154, %v1156
        %v1158 = vadd.f32 %v1154, %v1157
        %vm1159 = vweird.f32 %v1153
        %vm1160 = vweird.f32 %v1154
        %vm1161 = vmor %vm1159, %vm1160
        %v1162 = vsel %vm1161, %v1154, %v1158
        %v1163 = vand.u32 2147483647, %v1153
        %vm1164 = vcmp.eq.f32.partialorder %v1163, 8.507059e+37
        %v1165 = vand.u32 %v1153, 2147483648
        %v1166 = vor.u32 1.1754944e-38, %v1165
        %v1167 = vsel %vm1164, %v1166, %v1162
        %v1168 = vmul.f32 1.0, %v1167
        %v1169 = vtanh.pop %v1149
        %v1170 = vmul.f32 %v1168, %v1052
        %1172 = vrot.lane.b32.xlu0 %v1169, 64
        %v1173 = vpop.permute.xlu0 %1172
        %v1175 = vmul.f32 %v1168, %v1173
        %1177 = vrot.lane.b32.xlu0 %v1175, 32
        %v1178 = vpop.permute.xlu0 %1177
        %v1180 = vadd.f32 %v1170, %v1178
        %v1181 = vtanh.pop %v1180
        %1183 = vrot.lane.b32.xlu0 %v1181, 64
        %v1184 = vpop.permute.xlu0 %1183
        %v1186 = vmul.f32 %v1168, %v1184
        %1188 = vrot.lane.b32.xlu0 %v1186, 32
        %v1189 = vpop.permute.xlu0 %1188
        %1191 = vrot.lane.b32.xlu0 %v1120, 64
        %v1192 = vpop.permute.xlu0 %1191
        %v1194 = vsel %vm327, %v1189, %v1192
        %v1195 = vpack.c.bf16 %v1194, %v1194
        %v1197 = vsel %vm423, %v1195, 0
        %1199 = vmatpush.bf16.msra.mxu0 0
        %1200 = vmatpush.bf16.msra.mxu0 0
        %1201 = vmatpush.bf16.msra.mxu0 0
        %1202 = vmatpush.bf16.msra.mxu0 0
        %1203 = vmatpush.bf16.msra.mxu0 %v418
        %1204 = vmatpush.bf16.msra.mxu0 %v417
        %1205 = vmatpush.bf16.msra.mxu0 %v416
        %1206 = vmatpush.bf16.msra.mxu0 %v415
        %1207 = vmatmul.bf16.gmra.mxu0 %v1197
        %v1208 = vpop.f32.mrf.mxu0
        %v1209 = vadd.f32 %v397, %v1208
        %v1210 = vpop.f32.mrf.mxu0
        %1211 = vdwg.mxu0
        %v1212 = vxor.u32 %v1209, 2147483648
        %v1213 = vmul.f32 %v1212, 1.442695
        %v1214 = vpow.pop %v1213
        %v1215 = vadd.f32 %v1214, 1.0
        %v1216 = vrcp.pop %v1215
        %v1217 = vmul.f32 %v1215, %v1216
        %v1218 = vsub.f32 1.0, %v1217
        %v1219 = vmul.f32 %v1216, %v1218
        %v1220 = vadd.f32 %v1216, %v1219
        %vm1221 = vweird.f32 %v1215
        %vm1222 = vweird.f32 %v1216
        %vm1223 = vmor %vm1221, %vm1222
        %v1224 = vsel %vm1223, %v1216, %v1220
        %v1225 = vand.u32 2147483647, %v1215
        %vm1226 = vcmp.eq.f32.partialorder %v1225, 8.507059e+37
        %v1227 = vand.u32 %v1215, 2147483648
        %v1228 = vor.u32 1.1754944e-38, %v1227
        %v1229 = vsel %vm1226, %v1228, %v1224
        %v1230 = vmul.f32 1.0, %v1229
        %v1231 = vtanh.pop %v1209
        %v1232 = vmul.f32 %v1230, %v1114
        %1234 = vrot.lane.b32.xlu0 %v1231, 64
        %v1235 = vpop.permute.xlu0 %1234
        %v1237 = vmul.f32 %v1230, %v1235
        %1239 = vrot.lane.b32.xlu0 %v1237, 32
        %v1240 = vpop.permute.xlu0 %1239
        %v1242 = vadd.f32 %v1232, %v1240
        %v1243 = vtanh.pop %v1242
        %1245 = vrot.lane.b32.xlu0 %v1243, 64
        %v1246 = vpop.permute.xlu0 %1245
        %v1248 = vmul.f32 %v1230, %v1246
        %1250 = vrot.lane.b32.xlu0 %v1248, 32
        %v1251 = vpop.permute.xlu0 %1250
        %s1253 = scalar_lea.vmem %s269, 24 [#allocation4]
        %1254 = vst.msk [vmem:[%s1253] sm:$0xf] %vm485, %v1251
        %s1255 = scalar_lea.vmem %s281, 28
        %v1256 = vld [vmem:[%s1255] sm:$0xf]
        %v1257 = vpack.c.bf16 %v1186, %v1186
        %1259 = vrot.lane.b32.xlu0 %v1257, 32
        %v1260 = vpop.permute.xlu0 %1259
        %v1262 = vsel %vm327, %v1260, 0
        %1264 = vmatpush.bf16.msra.mxu0 0
        %1265 = vmatpush.bf16.msra.mxu0 0
        %1266 = vmatpush.bf16.msra.mxu0 0
        %1267 = vmatpush.bf16.msra.mxu0 0
        %1268 = vmatpush.bf16.msra.mxu0 0
        %1269 = vmatpush.bf16.msra.mxu0 0
        %1270 = vmatpush.bf16.msra.mxu0 %v324
        %1271 = vmatpush.bf16.msra.mxu0 %v323
        %1272 = vmatmul.bf16.gmra.mxu0 %v1262
        %v1273 = vpop.f32.mrf.mxu0
        %v1274 = vadd.f32 0.0, %v1273
        %v1275 = vpop.f32.mrf.mxu0
        %1276 = vdwg.mxu0
        %v1277 = vadd.f32 %v1256, %v1274
        %v1278 = vxor.u32 %v1277, 2147483648
        %v1279 = vmul.f32 %v1278, 1.442695
        %v1280 = vpow.pop %v1279
        %v1281 = vadd.f32 %v1280, 1.0
        %v1282 = vrcp.pop %v1281
        %v1283 = vmul.f32 %v1281, %v1282
        %v1284 = vsub.f32 1.0, %v1283
        %v1285 = vmul.f32 %v1282, %v1284
        %v1286 = vadd.f32 %v1282, %v1285
        %vm1287 = vweird.f32 %v1281
        %vm1288 = vweird.f32 %v1282
        %vm1289 = vmor %vm1287, %vm1288
        %v1290 = vsel %vm1289, %v1282, %v1286
        %v1291 = vand.u32 2147483647, %v1281
        %vm1292 = vcmp.eq.f32.partialorder %v1291, 8.507059e+37
        %v1293 = vand.u32 %v1281, 2147483648
        %v1294 = vor.u32 1.1754944e-38, %v1293
        %v1295 = vsel %vm1292, %v1294, %v1290
        %v1296 = vmul.f32 1.0, %v1295
        %v1297 = vtanh.pop %v1277
        %v1298 = vmul.f32 %v1296, %v1180
        %1300 = vrot.lane.b32.xlu0 %v1297, 64
        %v1301 = vpop.permute.xlu0 %1300
        %v1303 = vmul.f32 %v1296, %v1301
        %1305 = vrot.lane.b32.xlu0 %v1303, 32
        %v1306 = vpop.permute.xlu0 %1305
        %v1308 = vadd.f32 %v1298, %v1306
        %v1309 = vtanh.pop %v1308
        %1311 = vrot.lane.b32.xlu0 %v1309, 64
        %v1312 = vpop.permute.xlu0 %1311
        %v1314 = vmul.f32 %v1296, %v1312
        %1316 = vrot.lane.b32.xlu0 %v1314, 32
        %v1317 = vpop.permute.xlu0 %1316
        %1319 = vrot.lane.b32.xlu0 %v1248, 64
        %v1320 = vpop.permute.xlu0 %1319
        %v1322 = vsel %vm327, %v1317, %v1320
        %v1323 = vpack.c.bf16 %v1322, %v1322
        %v1325 = vsel %vm423, %v1323, 0
        %1327 = vmatpush.bf16.msra.mxu0 0
        %1328 = vmatpush.bf16.msra.mxu0 0
        %1329 = vmatpush.bf16.msra.mxu0 0
        %1330 = vmatpush.bf16.msra.mxu0 0
        %1331 = vmatpush.bf16.msra.mxu0 %v418
        %1332 = vmatpush.bf16.msra.mxu0 %v417
        %1333 = vmatpush.bf16.msra.mxu0 %v416
        %1334 = vmatpush.bf16.msra.mxu0 %v415
        %1335 = vmatmul.bf16.gmra.mxu0 %v1325
        %v1336 = vpop.f32.mrf.mxu0
        %v1337 = vadd.f32 %v397, %v1336
        %v1338 = vpop.f32.mrf.mxu0
        %1339 = vdwg.mxu0
        %v1340 = vxor.u32 %v1337, 2147483648
        %v1341 = vmul.f32 %v1340, 1.442695
        %v1342 = vpow.pop %v1341
        %v1343 = vadd.f32 %v1342, 1.0
        %v1344 = vrcp.pop %v1343
        %v1345 = vmul.f32 %v1343, %v1344
        %v1346 = vsub.f32 1.0, %v1345
        %v1347 = vmul.f32 %v1344, %v1346
        %v1348 = vadd.f32 %v1344, %v1347
        %vm1349 = vweird.f32 %v1343
        %vm1350 = vweird.f32 %v1344
        %vm1351 = vmor %vm1349, %vm1350
        %v1352 = vsel %vm1351, %v1344, %v1348
        %v1353 = vand.u32 2147483647, %v1343
        %vm1354 = vcmp.eq.f32.partialorder %v1353, 8.507059e+37
        %v1355 = vand.u32 %v1343, 2147483648
        %v1356 = vor.u32 1.1754944e-38, %v1355
        %v1357 = vsel %vm1354, %v1356, %v1352
        %v1358 = vmul.f32 1.0, %v1357
        %v1359 = vtanh.pop %v1337
        %v1360 = vmul.f32 %v1358, %v1242
        %1362 = vrot.lane.b32.xlu0 %v1359, 64
        %v1363 = vpop.permute.xlu0 %1362
        %v1365 = vmul.f32 %v1358, %v1363
        %1367 = vrot.lane.b32.xlu0 %v1365, 32
        %v1368 = vpop.permute.xlu0 %1367
        %v1370 = vadd.f32 %v1360, %v1368
        %v1371 = vtanh.pop %v1370
        %1373 = vrot.lane.b32.xlu0 %v1371, 64
        %v1374 = vpop.permute.xlu0 %1373
        %v1376 = vmul.f32 %v1358, %v1374
        %1378 = vrot.lane.b32.xlu0 %v1376, 32
        %v1379 = vpop.permute.xlu0 %1378
        %s1381 = scalar_lea.vmem %s269, 28 [#allocation4]
        %1382 = vst.msk [vmem:[%s1381] sm:$0xf] %vm485, %v1379
        %1383 = vst.msk [vmem:[#allocation2] sm:$0xf] %vm485, %v1317
        %1385 = vrot.lane.b32.xlu0 %v1308, 96
        %v1386 = vpop.permute.xlu0 %1385
        %1388 = vst.msk [vmem:[#allocation3] sm:$0xf] %vm485, %v1386
        %1389 = vst.msk [vmem:[%s309] sm:$0xf] %vm485, %v1379
        %1391 = vrot.lane.b32.xlu0 %v1370, 96
        %v1392 = vpop.permute.xlu0 %1391
        %1394 = vst.msk [vmem:[%s311] sm:$0xf] %vm485, %v1392
        %p1395 = scmp.eq.s32.totalorder %s27, 1
        // Predicated region
        $region41: #{rnn_base_lstm_forward.3} parent=35 // pred_check
          %p1396 = pneg %p1395
        $region42: #{rnn_base_lstm_forward.3} parent=35 // pred_check_branch
          %1398 = sbr.rel (%p1396) target = $region44
        $region43: #{rnn_base_lstm_forward.3} parent=35 // pred_region
          %1399 = vst.msk [vmem:[#allocation6] sm:$0xf] %vm485, %v1317
          %s1400 = scalar_lea.vmem [#allocation6], 4
          %1401 = vst.msk [vmem:[%s1400] sm:$0xf] %vm485, %v1379
          %1402 = vst.msk [vmem:[#allocation8] sm:$0xf] %vm485, %v1386
          %s1403 = scalar_lea.vmem [#allocation8], 4
          %1404 = vst.msk [vmem:[%s1403] sm:$0xf] %vm485, %v1392
        $region44: #{rnn_base_lstm_forward.3} parent=35 // pred_fallthru
          _
        %s1405 = sand.u32 %s135, 1
        %s1406 = scalar_lea.sflag [#allocation5], %s1405
        %s1407 = sand.u32 %s135, 1
        %s1408 = smul.addr %s1407, 32
        %s1409 = scalar_lea.vmem [#allocation4], %s1408
        // Predicated region
        $region45: #{rnn_base_lstm_forward.3} parent=35 // pred_check
          %p1410 = pneg %p145
        $region46: #{rnn_base_lstm_forward.3} parent=35 // pred_check_branch
          %1412 = sbr.rel (%p1410) target = $region48
        $region47: #{rnn_base_lstm_forward.3} parent=35 // pred_region
          %s1413 = smul.u32 8, %s27
          %1415 = vsyncadd %s1406, 0
          %s1416 = sadd.s32 %s26, %s1413
          %s1417 = smul.addr %s1416, 4
          %s1418 = scalar_lea.hbm %s4, %s1417
          %s1419 = sshll.u32 %s1409, 4
          %s1420 = int_to_ptr.vmem [resolvable:$true] %s1419
          %s1421 = sshll.u32 %s1418, 4
          %s1422 = int_to_ptr.hbm [resolvable:$true] %s1421
          %1427 = dma.vmem_to_hbm [thread:$0]  %s1420, 512, %s1422, %s1406, 64, 64, 4
        $region48: #{rnn_base_lstm_forward.3} parent=35 // pred_fallthru
          _
        // Predicated region
        $region49: #{rnn_base_lstm_forward.3} parent=35 // pred_check
          %p1428 = pneg %p171
        $region50: #{rnn_base_lstm_forward.3} parent=35 // pred_check_branch
          %1430 = sbr.rel (%p1428) target = $region52
        $region51: #{rnn_base_lstm_forward.3} parent=35 // pred_region
          %1432 = vsyncadd [#allocation7], 0
          %s1433 = smul.addr %s26, 4
          %s1434 = scalar_lea.hbm %s5, %s1433
          %s1435 = sshll.u32 [#allocation6], 4
          %s1436 = int_to_ptr.vmem [resolvable:$true] %s1435
          %s1437 = sshll.u32 %s1434, 4
          %s1438 = int_to_ptr.hbm [resolvable:$true] %s1437
          %1443 = dma.vmem_to_hbm [thread:$0]  %s1436, 128, %s1438, [#allocation7], 64, 64, 4
        $region52: #{rnn_base_lstm_forward.3} parent=35 // pred_fallthru
          _
        // Predicated region
        $region53: #{rnn_base_lstm_forward.3} parent=35 // pred_check
          %p1444 = pneg %p197
        $region54: #{rnn_base_lstm_forward.3} parent=35 // pred_check_branch
          %1446 = sbr.rel (%p1444) target = $region56
        $region55: #{rnn_base_lstm_forward.3} parent=35 // pred_region
          %1448 = vsyncadd [#allocation7], 0
          %s1449 = smul.addr %s26, 4
          %s1450 = scalar_lea.hbm %s6, %s1449
          %s1451 = sshll.u32 [#allocation8], 4
          %s1452 = int_to_ptr.vmem [resolvable:$true] %s1451
          %s1453 = sshll.u32 %s1450, 4
          %s1454 = int_to_ptr.hbm [resolvable:$true] %s1453
          %1459 = dma.vmem_to_hbm [thread:$0]  %s1452, 128, %s1454, [#allocation7], 64, 64, 4
        $region56: #{rnn_base_lstm_forward.3} parent=35 // pred_fallthru
          _
        // Predicated region
        $region57: #{rnn_base_lstm_forward.3} parent=35 // pred_check
          %p1460 = pneg %p171
        $region58: #{rnn_base_lstm_forward.3} parent=35 // pred_check_branch
          %1462 = sbr.rel (%p1460) target = $region60
        $region59: #{rnn_base_lstm_forward.3} parent=35 // pred_region
          %1464 = dma.done [#allocation7], 128
        $region60: #{rnn_base_lstm_forward.3} parent=35 // pred_fallthru
          _
        // Predicated region
        $region61: #{rnn_base_lstm_forward.3} parent=35 // pred_check
          %p1465 = pneg %p197
        $region62: #{rnn_base_lstm_forward.3} parent=35 // pred_check_branch
          %1467 = sbr.rel (%p1465) target = $region64
        $region63: #{rnn_base_lstm_forward.3} parent=35 // pred_region
          %1469 = dma.done [#allocation7], 128
        $region64: #{rnn_base_lstm_forward.3} parent=35 // pred_fallthru
          _
      $region36: #{rnn_base_lstm_forward.3} parent=5 // pred_fallthru
        _
      %p1470 = scmp.le.s32.totalorder 2, %s17
      // Predicated region
      $region65: #{rnn_base_lstm_forward.3} parent=5 // pred_check
        %p1471 = pneg %p1470
      $region66: #{rnn_base_lstm_forward.3} parent=5 // pred_check_branch
        %1473 = sbr.rel (%p1471) target = $region68
      $region67: #{rnn_base_lstm_forward.3} parent=5 // pred_region
        %s1474 = ssub.s32 %s17, 2
        // Predicated region
        $region69: #{rnn_base_lstm_forward.3} parent=67 // pred_check
          %p1475 = pneg %p151
        $region70: #{rnn_base_lstm_forward.3} parent=67 // pred_check_branch
          %1477 = sbr.rel (%p1475) target = $region72
        $region71: #{rnn_base_lstm_forward.3} parent=67 // pred_region
          %s1478 = sand.u32 %s136, 1
          %s1479 = scalar_lea.sflag [#allocation5], %s1478
          %s1480 = sand.u32 %s136, 1
          %s1481 = smul.addr %s1480, 32
          %s1482 = scalar_lea.vmem [#allocation4], %s1481
          %1484 = dma.done %s1479, 512
        $region72: #{rnn_base_lstm_forward.3} parent=67 // pred_fallthru
          _
      $region68: #{rnn_base_lstm_forward.3} parent=5 // pred_fallthru
        _
    $region6: #{rnn_base_lstm_forward.3} parent=1 // loop_footer
      %s21 = sadd.s32 1, %s17
    $region7: #{rnn_base_lstm_forward.3} parent=1 // loop_footer_branch
      %16 = sbr.rel target = $region3
    $region8: #{rnn_base_lstm_forward.3} parent=1 // loop_exit
      _
    %1485 = vsyncpa [#allocation5], 1
    %s1486 = scalar_lea.sflag [#allocation5], 1
    %1487 = vsyncpa %s1486, 1
    %1488 = vsyncpa [#allocation7], 1

</llo_original>
